<compile_context>
chip_gen: v7x
topology: tpu7x:2x2x1
jax: 0.10.0
libtpu: 0.0.40
codegen_flags: <defaults>
</compile_context>

<pallas_src>
import functools

import jax
import jax.numpy as jnp
from jax.experimental import pallas as pl
from jax.experimental.pallas import tpu as pltpu


def _sigmoid(x):
    # simple, Mosaic-friendly sigmoid (values stay moderate; no special casing needed)
    return 1.0 / (1.0 + jnp.exp(-x))


def _mfvi_kernel(mask_ref, span_ref, pair_ref, logit_ref, marg_ref, *, max_iter):
    span = span_ref[...].astype(jnp.float32)      # [bt, S, S]
    pair = pair_ref[...].astype(jnp.float32)      # [bt, S, S, S]  (upcast after load)
    m = mask_ref[...]                             # [bt, S, S] float {0,1}
    S = span.shape[-1]

    # mask2o validity term, batch-independent:
    #   valid[i, j, k] = (min(i, j) != k) & (max(i, j) != k)
    i_idx = jax.lax.broadcasted_iota(jnp.int32, (S, S, S), 0)
    j_idx = jax.lax.broadcasted_iota(jnp.int32, (S, S, S), 1)
    k_idx = jax.lax.broadcasted_iota(jnp.int32, (S, S, S), 2)
    lo = jnp.minimum(i_idx, j_idx)
    hi = jnp.maximum(i_idx, j_idx)
    valid = (lo != k_idx) & (hi != k_idx)

    spv = jnp.where(valid[None], pair, 0.0)       # [bt, S, S, S]

    q = span
    for _ in range(max_iter):
        qs = _sigmoid(q)                                         # [bt, S, S]
        red = jnp.sum(qs[:, :, None, :] * spv, axis=-1)          # lane reduce over k
        q = span + m * red                                       # mask factored out of k-sum

    logit_ref[...] = q.astype(logit_ref.dtype)
    marg_ref[...] = _sigmoid(q).astype(marg_ref.dtype)


def _pick_bt(B, S, itemsize):
    # keep per-step working set comfortably inside v7x's 64 MiB VMEM (double-buffered
    # s_pair block + f32 copy + one product temp), while keeping >=2 grid steps so both
    # v7x TensorCores get work when B >= 2.
    budget = 24 * 1024 * 1024
    per_batch = S ** 3 * (2 * itemsize + 3 * 4) + 16 * S * S * 4
    cap = max(1, budget // per_batch)
    if B >= 2:
        cap = min(cap, B // 2)
    cap = max(1, cap)
    bt = 1
    for d in range(1, min(B, cap) + 1):
        if B % d == 0:
            bt = d
    return bt


def constituency_mfvi_logits_marginals(s_span, s_pair, mask, max_iter=3):
    B, S, _ = mask.shape
    itemsize = jnp.dtype(s_pair.dtype).itemsize
    bt = _pick_bt(B, S, itemsize)
    per_step = bt * (S ** 3 * (2 * itemsize + 3 * 4) + 16 * S * S * 4)
    vmem_limit = int(min(max(per_step + (4 << 20), 16 << 20), 100 << 20))
    # TODO(synk): for very large S (per-step working set > ~48 MiB) add i-axis blocking
    # so a single batch element still fits v7x's 64 MiB VMEM.

    kernel = functools.partial(_mfvi_kernel, max_iter=max_iter)
    logits, marginals = pl.pallas_call(
        kernel,
        out_shape=(jax.ShapeDtypeStruct((B, S, S), jnp.float32),
                   jax.ShapeDtypeStruct((B, S, S), jnp.float32)),
        grid=(B // bt,),
        in_specs=[
            pl.BlockSpec((bt, S, S), lambda b: (b, 0, 0)),
            pl.BlockSpec((bt, S, S), lambda b: (b, 0, 0)),
            pl.BlockSpec((bt, S, S, S), lambda b: (b, 0, 0, 0)),
        ],
        out_specs=(pl.BlockSpec((bt, S, S), lambda b: (b, 0, 0)),
                   pl.BlockSpec((bt, S, S), lambda b: (b, 0, 0))),
        compiler_params=pltpu.CompilerParams(
            dimension_semantics=("parallel",),
            vmem_limit_bytes=vmem_limit),
    )(mask.astype(jnp.float32), s_span, s_pair)
    return logits, marginals


def constituency_mfvi(s_span, s_pair, mask, target=None, max_iter=3):
    """Pallas port of ConstituencyMFVI.forward(scores=(s_span, s_pair), mask, target)."""
    logits, marginals = constituency_mfvi_logits_marginals(s_span, s_pair, mask, max_iter)
    if target is None:
        return marginals
    # F.binary_cross_entropy_with_logits(logits[mask], target[mask].float()) (mean reduction),
    # computed in plain JAX on the tiny [B,S,S] logits output.
    t = target.astype(jnp.float32)
    per = jnp.maximum(logits, 0.0) - logits * t + jnp.log1p(jnp.exp(-jnp.abs(logits)))
    mf = mask.astype(jnp.float32)
    loss = jnp.sum(per * mf) / jnp.maximum(jnp.sum(mf), 1.0)
    return loss, marginals


def _reference(s_span, s_pair, mask, max_iter=3):
    """Pure-JAX mirror of the PyTorch mfvi() (same movedims / permutes)."""
    B, S, _ = mask.shape
    ii = jnp.arange(S)
    ls = jnp.minimum(ii[:, None], ii[None, :])
    rs = jnp.maximum(ii[:, None], ii[None, :])
    m = jnp.moveaxis(mask, 0, 2)                                   # [S, S, B]
    m2o = jnp.broadcast_to(m[:, :, None, :], (S, S, S, B))
    m2o = m2o & (ls[:, :, None] != ii[None, None, :])[..., None]
    m2o = m2o & (rs[:, :, None] != ii[None, None, :])[..., None]
    span = jnp.moveaxis(s_span, 0, 2)                              # [S, S, B]
    pair = jnp.transpose(s_pair, (1, 2, 3, 0)) * m2o               # [S, S, S, B]
    q = span
    for _ in range(max_iter):
        q = jax.nn.sigmoid(q)
        q = span + jnp.sum(q[:, None, :, :] * pair, axis=2)
    logits = jnp.transpose(q, (2, 0, 1))
    return logits, jax.nn.sigmoid(logits)


if __name__ == "__main__":
    B, S = 2, 16
    key = jax.random.PRNGKey(0)
    k1, k2, k3 = jax.random.split(key, 3)
    s_span = jax.random.normal(k1, (B, S, S), jnp.float32)
    s_pair = jax.random.normal(k2, (B, S, S, S), jnp.float32) * 0.1
    lengths = jnp.array([S, S - 4])
    ii = jnp.arange(S)
    # typical constituency chart mask: i < j and j within the sentence length
    mask = (ii[None, :, None] < ii[None, None, :]) & (ii[None, None, :] < lengths[:, None, None])

    # inference path (target=None) -> marginals
    marg = constituency_mfvi(s_span, s_pair, mask, max_iter=3)
    marg = jax.block_until_ready(marg)

    ref_logits, ref_marg = _reference(s_span, s_pair, mask, max_iter=3)
    if not bool(jnp.allclose(marg, ref_marg, atol=2e-5, rtol=1e-4)):
        raise AssertionError(
            f"marginal mismatch, max abs err = {float(jnp.max(jnp.abs(marg - ref_marg)))}")

    # training path (target given) -> (loss, marginals)
    target = jax.random.bernoulli(k3, 0.3, (B, S, S))
    loss, _ = constituency_mfvi(s_span, s_pair, mask, target=target, max_iter=3)
    loss = jax.block_until_ready(loss)
    t = target.astype(jnp.float32)
    per = jnp.maximum(ref_logits, 0.0) - ref_logits * t + jnp.log1p(jnp.exp(-jnp.abs(ref_logits)))
    mf = mask.astype(jnp.float32)
    ref_loss = jnp.sum(per * mf) / jnp.maximum(jnp.sum(mf), 1.0)
    if not bool(jnp.allclose(loss, ref_loss, atol=1e-5, rtol=1e-4)):
        raise AssertionError(f"loss mismatch: {float(loss)} vs {float(ref_loss)}")

    print("KERNEL_OK")
</pallas_src>

<mosaic_0001>
module attributes {stable_mosaic.version = 11 : i64} {
  func.func @_mfvi_kernel(%arg0: i32, %arg1: memref<1x16x16xf32, #tpu.memory_space<vmem>>, %arg2: memref<1x16x16xf32, #tpu.memory_space<vmem>>, %arg3: memref<1x16x16x16xf32, #tpu.memory_space<vmem>>, %arg4: memref<1x16x16xf32, #tpu.memory_space<vmem>>, %arg5: memref<1x16x16xf32, #tpu.memory_space<vmem>>) attributes {dimension_semantics = [#tpu.dimension_semantics<parallel>], iteration_bounds = array<i64: 2>, scalar_prefetch = 0 : i64, scratch_operands = 0 : i64, tpu.core_type = #tpu.core_type<tc>, window_params = [{transform_indices = @transform_0, window_bounds = array<i64: 1, 16, 16>}, {transform_indices = @transform_1, window_bounds = array<i64: 1, 16, 16>}, {transform_indices = @transform_2, window_bounds = array<i64: 1, 16, 16, 16>}, {transform_indices = @transform_3, window_bounds = array<i64: 1, 16, 16>}, {transform_indices = @transform_4, window_bounds = array<i64: 1, 16, 16>}]} {
    %c0 = arith.constant 0 : index
    %c0_0 = arith.constant 0 : index
    %c0_1 = arith.constant 0 : index
    %0 = vector.load %arg2[%c0, %c0_0, %c0_1] : memref<1x16x16xf32, #tpu.memory_space<vmem>>, vector<1x16x16xf32>
    %c0_2 = arith.constant 0 : index
    %c0_3 = arith.constant 0 : index
    %c0_4 = arith.constant 0 : index
    %c0_5 = arith.constant 0 : index
    %1 = vector.load %arg3[%c0_2, %c0_3, %c0_4, %c0_5] : memref<1x16x16x16xf32, #tpu.memory_space<vmem>>, vector<1x16x16x16xf32>
    %c0_6 = arith.constant 0 : index
    %c0_7 = arith.constant 0 : index
    %c0_8 = arith.constant 0 : index
    %2 = vector.load %arg1[%c0_6, %c0_7, %c0_8] : memref<1x16x16xf32, #tpu.memory_space<vmem>>, vector<1x16x16xf32>
    %3 = tpu.iota {dimensions = array<i32: 0>} : vector<16x16x16xi32>
    %4 = tpu.iota {dimensions = array<i32: 1>} : vector<16x16x16xi32>
    %5 = tpu.iota {dimensions = array<i32: 2>} : vector<16x16x16xi32>
    %6 = arith.minsi %3, %4 : vector<16x16x16xi32>
    %7 = arith.maxsi %3, %4 : vector<16x16x16xi32>
    %8 = arith.cmpi ne, %6, %5 : vector<16x16x16xi32>
    %9 = arith.cmpi ne, %7, %5 : vector<16x16x16xi32>
    %10 = arith.andi %8, %9 : vector<16x16x16xi1>
    %11 = vector.shape_cast %10 : vector<16x16x16xi1> to vector<1x16x16x16xi1>
    %cst = arith.constant 0.000000e+00 : f32
    %12 = vector.broadcast %cst : f32 to vector<1x16x16x16xf32>
    %13 = arith.select %11, %1, %12 : vector<1x16x16x16xi1>, vector<1x16x16x16xf32>
    %cst_9 = arith.constant 0.000000e+00 : f32
    %14 = vector.broadcast %cst_9 : f32 to vector<1x16x16xf32>
    %15 = arith.subf %14, %0 : vector<1x16x16xf32>
    %16 = math.exp %15 : vector<1x16x16xf32>
    %cst_10 = arith.constant 1.000000e+00 : f32
    %17 = vector.broadcast %cst_10 : f32 to vector<1x16x16xf32>
    %18 = arith.addf %17, %16 : vector<1x16x16xf32>
    %cst_11 = arith.constant 1.000000e+00 : f32
    %19 = vector.broadcast %cst_11 : f32 to vector<1x16x16xf32>
    %20 = arith.divf %19, %18 : vector<1x16x16xf32>
    %21 = vector.shape_cast %20 : vector<1x16x16xf32> to vector<1x16x1x16xf32>
    %22 = vector.broadcast %21 : vector<1x16x1x16xf32> to vector<1x16x16x16xf32>
    %23 = arith.mulf %22, %13 : vector<1x16x16x16xf32>
    %cst_12 = arith.constant dense<0.000000e+00> : vector<1x16x16xf32>
    %24 = vector.multi_reduction <add>, %23, %cst_12 [3] : vector<1x16x16x16xf32> to vector<1x16x16xf32>
    %25 = arith.mulf %2, %24 : vector<1x16x16xf32>
    %26 = arith.addf %0, %25 : vector<1x16x16xf32>
    %cst_13 = arith.constant 0.000000e+00 : f32
    %27 = vector.broadcast %cst_13 : f32 to vector<1x16x16xf32>
    %28 = arith.subf %27, %26 : vector<1x16x16xf32>
    %29 = math.exp %28 : vector<1x16x16xf32>
    %cst_14 = arith.constant 1.000000e+00 : f32
    %30 = vector.broadcast %cst_14 : f32 to vector<1x16x16xf32>
    %31 = arith.addf %30, %29 : vector<1x16x16xf32>
    %cst_15 = arith.constant 1.000000e+00 : f32
    %32 = vector.broadcast %cst_15 : f32 to vector<1x16x16xf32>
    %33 = arith.divf %32, %31 : vector<1x16x16xf32>
    %34 = vector.shape_cast %33 : vector<1x16x16xf32> to vector<1x16x1x16xf32>
    %35 = vector.broadcast %34 : vector<1x16x1x16xf32> to vector<1x16x16x16xf32>
    %36 = arith.mulf %35, %13 : vector<1x16x16x16xf32>
    %cst_16 = arith.constant dense<0.000000e+00> : vector<1x16x16xf32>
    %37 = vector.multi_reduction <add>, %36, %cst_16 [3] : vector<1x16x16x16xf32> to vector<1x16x16xf32>
    %38 = arith.mulf %2, %37 : vector<1x16x16xf32>
    %39 = arith.addf %0, %38 : vector<1x16x16xf32>
    %cst_17 = arith.constant 0.000000e+00 : f32
    %40 = vector.broadcast %cst_17 : f32 to vector<1x16x16xf32>
    %41 = arith.subf %40, %39 : vector<1x16x16xf32>
    %42 = math.exp %41 : vector<1x16x16xf32>
    %cst_18 = arith.constant 1.000000e+00 : f32
    %43 = vector.broadcast %cst_18 : f32 to vector<1x16x16xf32>
    %44 = arith.addf %43, %42 : vector<1x16x16xf32>
    %cst_19 = arith.constant 1.000000e+00 : f32
    %45 = vector.broadcast %cst_19 : f32 to vector<1x16x16xf32>
    %46 = arith.divf %45, %44 : vector<1x16x16xf32>
    %47 = vector.shape_cast %46 : vector<1x16x16xf32> to vector<1x16x1x16xf32>
    %48 = vector.broadcast %47 : vector<1x16x1x16xf32> to vector<1x16x16x16xf32>
    %49 = arith.mulf %48, %13 : vector<1x16x16x16xf32>
    %cst_20 = arith.constant dense<0.000000e+00> : vector<1x16x16xf32>
    %50 = vector.multi_reduction <add>, %49, %cst_20 [3] : vector<1x16x16x16xf32> to vector<1x16x16xf32>
    %51 = arith.mulf %2, %50 : vector<1x16x16xf32>
    %52 = arith.addf %0, %51 : vector<1x16x16xf32>
    %c0_21 = arith.constant 0 : index
    %c0_22 = arith.constant 0 : index
    %c0_23 = arith.constant 0 : index
    %53 = vector.load %arg4[%c0_21, %c0_22, %c0_23] : memref<1x16x16xf32, #tpu.memory_space<vmem>>, vector<1x16x16xf32>
    tpu.vector_store %arg4[%c0_21, %c0_22, %c0_23], %52 {strides = array<i32>} : memref<1x16x16xf32, #tpu.memory_space<vmem>>, vector<1x16x16xf32>,
    %cst_24 = arith.constant 0.000000e+00 : f32
    %54 = vector.broadcast %cst_24 : f32 to vector<1x16x16xf32>
    %55 = arith.subf %54, %52 : vector<1x16x16xf32>
    %56 = math.exp %55 : vector<1x16x16xf32>
    %cst_25 = arith.constant 1.000000e+00 : f32
    %57 = vector.broadcast %cst_25 : f32 to vector<1x16x16xf32>
    %58 = arith.addf %57, %56 : vector<1x16x16xf32>
    %cst_26 = arith.constant 1.000000e+00 : f32
    %59 = vector.broadcast %cst_26 : f32 to vector<1x16x16xf32>
    %60 = arith.divf %59, %58 : vector<1x16x16xf32>
    %c0_27 = arith.constant 0 : index
    %c0_28 = arith.constant 0 : index
    %c0_29 = arith.constant 0 : index
    %61 = vector.load %arg5[%c0_27, %c0_28, %c0_29] : memref<1x16x16xf32, #tpu.memory_space<vmem>>, vector<1x16x16xf32>
    tpu.vector_store %arg5[%c0_27, %c0_28, %c0_29], %60 {strides = array<i32>} : memref<1x16x16xf32, #tpu.memory_space<vmem>>, vector<1x16x16xf32>,
    return
  }
  func.func @transform_0(%arg0: i32) -> (i32, i32, i32) {
    %c0_i32 = arith.constant 0 : i32
    %c0_i32_0 = arith.constant 0 : i32
    %c0_i32_1 = arith.constant 0 : i32
    return %arg0, %c0_i32, %c0_i32_0 : i32, i32, i32
  }
  func.func @transform_1(%arg0: i32) -> (i32, i32, i32) {
    %c0_i32 = arith.constant 0 : i32
    %c0_i32_0 = arith.constant 0 : i32
    %c0_i32_1 = arith.constant 0 : i32
    return %arg0, %c0_i32, %c0_i32_0 : i32, i32, i32
  }
  func.func @transform_2(%arg0: i32) -> (i32, i32, i32, i32) {
    %c0_i32 = arith.constant 0 : i32
    %c0_i32_0 = arith.constant 0 : i32
    %c0_i32_1 = arith.constant 0 : i32
    %c0_i32_2 = arith.constant 0 : i32
    return %arg0, %c0_i32, %c0_i32_0, %c0_i32_1 : i32, i32, i32, i32
  }
  func.func @transform_3(%arg0: i32) -> (i32, i32, i32) {
    %c0_i32 = arith.constant 0 : i32
    %c0_i32_0 = arith.constant 0 : i32
    %c0_i32_1 = arith.constant 0 : i32
    return %arg0, %c0_i32, %c0_i32_0 : i32, i32, i32
  }
  func.func @transform_4(%arg0: i32) -> (i32, i32, i32) {
    %c0_i32 = arith.constant 0 : i32
    %c0_i32_0 = arith.constant 0 : i32
    %c0_i32_1 = arith.constant 0 : i32
    return %arg0, %c0_i32, %c0_i32_0 : i32, i32, i32
  }
}

</mosaic_0001>

<llo_original>
// kernel: tpu_custom_call.1
$region0: #{tpu_custom_call.1}
  #allocation0 [shape = 'u32[]', space=smem, size = 0x4, offset = 0x4, fixed_abs, tag = 'smem constant byte address 0x4 - core index']
  #allocation1 [shape = 'u32[144,128]{1,0:T(1,128)}', space=vmem, size = 0x12000, scoped, tag = 'internal scratch']
  %s0 = inlined_call_operand.hbm [shape: f32[2,16,16], index: 0, kind: input, shape index: {}]
  %s1 = inlined_call_operand.hbm [shape: f32[2,16,16], index: 1, kind: input, shape index: {}]
  %s2 = inlined_call_operand.hbm [shape: f32[2,16,16,16], index: 2, kind: input, shape index: {}]
  %s3 = inlined_call_operand.hbm [shape: f32[2,16,16], index: 3, kind: output, shape index: {0}]
  %s4 = inlined_call_operand.hbm [shape: f32[2,16,16], index: 4, kind: output, shape index: {1}]
  %5 = xla_tuple %s3, %s4
  %s6 = sld [smem:[#allocation0]]
  $region65: #{tpu_custom_call.1} parent=0
    _
  %s8 = ssub.s32 1, %s6
  %s9 = scalar_select 0, %s8, %s6
  $region1: #{tpu_custom_call.1} parent=0
    #allocation2 [shape = 'u8[16384]{0}', space=vmem, size = 0x4000, scoped, tag = 'input window, operand 0']
    #allocation3 [shape = 's32[2]{0}', space=sflag, size = 0x8, scoped, tag = 'scoped memory for tpu_custom_call.1']
    #allocation4 [shape = 's32[2]{0}', space=sflag, size = 0x8, scoped, tag = 'scoped memory for tpu_custom_call.1']
    #allocation5 [shape = 'u8[16384]{0}', space=vmem, size = 0x4000, scoped, tag = 'input window, operand 1']
    #allocation6 [shape = 's32[2]{0}', space=sflag, size = 0x8, scoped, tag = 'scoped memory for tpu_custom_call.1']
    #allocation7 [shape = 'u8[262144]{0}', space=vmem, size = 0x40000, scoped, tag = 'input window, operand 2']
    #allocation8 [shape = 'u8[16384]{0}', space=vmem, size = 0x4000, scoped, tag = 'output window, operand 0']
    #allocation9 [shape = 'u8[16384]{0}', space=vmem, size = 0x4000, scoped, tag = 'output window, operand 1']
    #allocation10 [shape = 's32[2]{0}', space=sflag, size = 0x8, scoped, tag = 'scoped memory for tpu_custom_call.1']
    %10 = vsyncpa [#allocation3], 0
    %s11 = scalar_lea.sflag [#allocation3], 1
    %12 = vsyncpa %s11, 0
    %13 = vsyncpa [#allocation6], 0
    %s14 = scalar_lea.sflag [#allocation6], 1
    %15 = vsyncpa %s14, 0
    %16 = vsyncpa [#allocation4], 0
    %s17 = scalar_lea.sflag [#allocation4], 1
    %18 = vsyncpa %s17, 0
    %19 = vsyncpa [#allocation10], 0
    %s20 = scalar_lea.sflag [#allocation10], 1
    %21 = vsyncpa %s20, 0
    loop: start=0, step=1, limit=4
    $region2: #{tpu_custom_call.1} parent=1 // loop_pre_header
      _
    $region3: #{tpu_custom_call.1} parent=1 // loop_header
      %s23 = sphi 0, %s27
      %p24 = scmp.ge.s32.totalorder %s23, 4
      %s33 = sphi 0, %s35
      %s36 = sphi 0, %s33
      %s37 = sphi 0, %s36
      %s53 = sphi 0, %s37
      %s59 = sphi 0, %s61
      %s62 = sphi 0, %s59
      %s63 = sphi 0, %s62
      %s79 = sphi 0, %s63
      %s85 = sphi 0, %s87
      %s88 = sphi 0, %s85
      %s89 = sphi 0, %s88
      %s105 = sphi 0, %s89
      %s111 = sphi 0, %s113
      %s114 = sphi 0, %s111
      %s115 = sphi 0, %s114
      %s131 = sphi 0, %s115
      %s137 = sphi 0, %s139
      %s140 = sphi 0, %s137
      %s141 = sphi 0, %s140
      %s157 = sphi 0, %s141
    $region4: #{tpu_custom_call.1} parent=1 // loop_header_branch
      %26 = sbr.rel (%p24) target = $region8
    $region5: #{tpu_custom_call.1} parent=1 // loop_body
      %s28 = ssub.s32 %s23, 1
      %s29 = ssub.s32 %s23, 2
      %s30 = sadd.s32 %s23, 1
      %s31 = ssub.s32 %s23, %s30
      %p32 = scmp.eq.s32.totalorder %s31, 0
      %s34 = sadd.s32 %s33, 1
      %s35 = scalar_select %p32, %s33, %s34
      %p38 = pneg %p32
      %p39 = scmp.eq.s32.totalorder %s23, 1
      %p40 = por %p38, %p39
      %p41 = scmp.ne.s32.totalorder %s33, %s36
      %p42 = scmp.eq.s32.totalorder %s23, 0
      %p43 = por %p41, %p42
      %p44 = scmp.ne.s32.totalorder %s33, %s36
      %p45 = scmp.eq.s32.totalorder %s28, 1
      %p46 = por %p44, %p45
      %p47 = scmp.ne.s32.totalorder %s36, %s37
      %p48 = scmp.eq.s32.totalorder %s28, 0
      %p49 = por %p47, %p48
      %p50 = scmp.ne.s32.totalorder %s36, %s37
      %p51 = scmp.eq.s32.totalorder %s29, 1
      %p52 = por %p50, %p51
      %p54 = scmp.ne.s32.totalorder %s37, %s53
      %p55 = scmp.eq.s32.totalorder %s29, 0
      %p56 = por %p54, %p55
      %s57 = ssub.s32 %s23, %s30
      %p58 = scmp.eq.s32.totalorder %s57, 0
      %s60 = sadd.s32 %s59, 1
      %s61 = scalar_select %p58, %s59, %s60
      %p64 = pneg %p58
      %p65 = scmp.eq.s32.totalorder %s23, 1
      %p66 = por %p64, %p65
      %p67 = scmp.ne.s32.totalorder %s59, %s62
      %p68 = scmp.eq.s32.totalorder %s23, 0
      %p69 = por %p67, %p68
      %p70 = scmp.ne.s32.totalorder %s59, %s62
      %p71 = scmp.eq.s32.totalorder %s28, 1
      %p72 = por %p70, %p71
      %p73 = scmp.ne.s32.totalorder %s62, %s63
      %p74 = scmp.eq.s32.totalorder %s28, 0
      %p75 = por %p73, %p74
      %p76 = scmp.ne.s32.totalorder %s62, %s63
      %p77 = scmp.eq.s32.totalorder %s29, 1
      %p78 = por %p76, %p77
      %p80 = scmp.ne.s32.totalorder %s63, %s79
      %p81 = scmp.eq.s32.totalorder %s29, 0
      %p82 = por %p80, %p81
      %s83 = ssub.s32 %s23, %s30
      %p84 = scmp.eq.s32.totalorder %s83, 0
      %s86 = sadd.s32 %s85, 1
      %s87 = scalar_select %p84, %s85, %s86
      %p90 = pneg %p84
      %p91 = scmp.eq.s32.totalorder %s23, 1
      %p92 = por %p90, %p91
      %p93 = scmp.ne.s32.totalorder %s85, %s88
      %p94 = scmp.eq.s32.totalorder %s23, 0
      %p95 = por %p93, %p94
      %p96 = scmp.ne.s32.totalorder %s85, %s88
      %p97 = scmp.eq.s32.totalorder %s28, 1
      %p98 = por %p96, %p97
      %p99 = scmp.ne.s32.totalorder %s88, %s89
      %p100 = scmp.eq.s32.totalorder %s28, 0
      %p101 = por %p99, %p100
      %p102 = scmp.ne.s32.totalorder %s88, %s89
      %p103 = scmp.eq.s32.totalorder %s29, 1
      %p104 = por %p102, %p103
      %p106 = scmp.ne.s32.totalorder %s89, %s105
      %p107 = scmp.eq.s32.totalorder %s29, 0
      %p108 = por %p106, %p107
      %s109 = ssub.s32 %s23, %s30
      %p110 = scmp.eq.s32.totalorder %s109, 0
      %s112 = sadd.s32 %s111, 1
      %s113 = scalar_select %p110, %s111, %s112
      %p116 = pneg %p110
      %p117 = scmp.eq.s32.totalorder %s23, 1
      %p118 = por %p116, %p117
      %p119 = scmp.ne.s32.totalorder %s111, %s114
      %p120 = scmp.eq.s32.totalorder %s23, 0
      %p121 = por %p119, %p120
      %p122 = scmp.ne.s32.totalorder %s111, %s114
      %p123 = scmp.eq.s32.totalorder %s28, 1
      %p124 = por %p122, %p123
      %p125 = scmp.ne.s32.totalorder %s114, %s115
      %p126 = scmp.eq.s32.totalorder %s28, 0
      %p127 = por %p125, %p126
      %p128 = scmp.ne.s32.totalorder %s114, %s115
      %p129 = scmp.eq.s32.totalorder %s29, 1
      %p130 = por %p128, %p129
      %p132 = scmp.ne.s32.totalorder %s115, %s131
      %p133 = scmp.eq.s32.totalorder %s29, 0
      %p134 = por %p132, %p133
      %s135 = ssub.s32 %s23, %s30
      %p136 = scmp.eq.s32.totalorder %s135, 0
      %s138 = sadd.s32 %s137, 1
      %s139 = scalar_select %p136, %s137, %s138
      %p142 = pneg %p136
      %p143 = scmp.eq.s32.totalorder %s23, 1
      %p144 = por %p142, %p143
      %p145 = scmp.ne.s32.totalorder %s137, %s140
      %p146 = scmp.eq.s32.totalorder %s23, 0
      %p147 = por %p145, %p146
      %p148 = scmp.ne.s32.totalorder %s137, %s140
      %p149 = scmp.eq.s32.totalorder %s28, 1
      %p150 = por %p148, %p149
      %p151 = scmp.ne.s32.totalorder %s140, %s141
      %p152 = scmp.eq.s32.totalorder %s28, 0
      %p153 = por %p151, %p152
      %p154 = scmp.ne.s32.totalorder %s140, %s141
      %p155 = scmp.eq.s32.totalorder %s29, 1
      %p156 = por %p154, %p155
      %p158 = scmp.ne.s32.totalorder %s141, %s157
      %p159 = scmp.eq.s32.totalorder %s29, 0
      %p160 = por %p158, %p159
      %p161 = scmp.le.s32.totalorder 1, %s23
      %p162 = scmp.lt.s32.totalorder %s23, 3
      %p163 = pnand %p161, %p162
      %p164 = pneg %p163
      // Predicated region
      $region9: #{tpu_custom_call.1} parent=5 // pred_check
        _
      $region10: #{tpu_custom_call.1} parent=5 // pred_check_branch
        %166 = sbr.rel (%p163) target = $region12
      $region11: #{tpu_custom_call.1} parent=5 // pred_region
        %s167 = ssub.s32 %s23, 1
      $region12: #{tpu_custom_call.1} parent=5 // pred_fallthru
        _
      %p168 = scmp.lt.s32.totalorder %s23, 2
      // Predicated region
      $region13: #{tpu_custom_call.1} parent=5 // pred_check
        %p169 = pneg %p168
      $region14: #{tpu_custom_call.1} parent=5 // pred_check_branch
        %171 = sbr.rel (%p169) target = $region16
      $region15: #{tpu_custom_call.1} parent=5 // pred_region
        // Predicated region
        $region17: #{tpu_custom_call.1} parent=15 // pred_check
          %p172 = pneg %p43
        $region18: #{tpu_custom_call.1} parent=15 // pred_check_branch
          %174 = sbr.rel (%p172) target = $region20
        $region19: #{tpu_custom_call.1} parent=15 // pred_region
          %s175 = sand.u32 %s33, 1
          %s176 = scalar_lea.sflag [#allocation3], %s175
          %s177 = sand.u32 %s33, 1
          %s178 = smul.addr %s177, 16
          %s179 = scalar_lea.vmem [#allocation2], %s178
          %s181 = ssub.s32 256, 256
          %182 = vsyncadd %s176, %s181
          %s183 = smul.addr %s23, 2
          %s184 = smul.addr %s183, 128
          %s185 = scalar_lea.hbm %s0, %s184
          %s186 = sshll.u32 %s179, 4
          %s187 = int_to_ptr.vmem [resolvable:$true] %s186
          %192 = dma.hbm_to_vmem [thread:$0]  %s185, 256, %s187, %s176, 128, 128, 8
        $region20: #{tpu_custom_call.1} parent=15 // pred_fallthru
          _
        // Predicated region
        $region21: #{tpu_custom_call.1} parent=15 // pred_check
          %p193 = pneg %p69
        $region22: #{tpu_custom_call.1} parent=15 // pred_check_branch
          %195 = sbr.rel (%p193) target = $region24
        $region23: #{tpu_custom_call.1} parent=15 // pred_region
          %s196 = sand.u32 %s23, 1
          %s197 = scalar_lea.sflag [#allocation6], %s196
          %s198 = sand.u32 %s59, 1
          %s199 = smul.addr %s198, 16
          %s200 = scalar_lea.vmem [#allocation5], %s199
          %s202 = ssub.s32 256, 256
          %203 = vsyncadd %s197, %s202
          %s204 = smul.addr %s23, 2
          %s205 = smul.addr %s204, 128
          %s206 = scalar_lea.hbm %s1, %s205
          %s207 = sshll.u32 %s200, 4
          %s208 = int_to_ptr.vmem [resolvable:$true] %s207
          %213 = dma.hbm_to_vmem [thread:$0]  %s206, 256, %s208, %s197, 128, 128, 8
        $region24: #{tpu_custom_call.1} parent=15 // pred_fallthru
          _
        // Predicated region
        $region25: #{tpu_custom_call.1} parent=15 // pred_check
          %p214 = pneg %p95
        $region26: #{tpu_custom_call.1} parent=15 // pred_check_branch
          %216 = sbr.rel (%p214) target = $region28
        $region27: #{tpu_custom_call.1} parent=15 // pred_region
          %s217 = sand.u32 %s23, 1
          %s218 = scalar_lea.sflag [#allocation6], %s217
          %s219 = sand.u32 %s85, 1
          %s220 = smul.addr %s219, 256
          %s221 = scalar_lea.vmem [#allocation7], %s220
          %s223 = ssub.s32 4096, 4096
          %224 = vsyncadd %s218, %s223
          %s225 = smul.addr %s23, 32
          %s226 = smul.addr %s225, 128
          %s227 = scalar_lea.hbm %s2, %s226
          %s228 = sshll.u32 %s221, 4
          %s229 = int_to_ptr.vmem [resolvable:$true] %s228
          %234 = dma.hbm_to_vmem [thread:$0]  %s227, 4096, %s229, %s218, 128, 128, 8
        $region28: #{tpu_custom_call.1} parent=15 // pred_fallthru
          _
      $region16: #{tpu_custom_call.1} parent=5 // pred_fallthru
        _
      %p235 = scmp.le.s32.totalorder 1, %s23
      %p236 = scmp.lt.s32.totalorder %s23, 3
      %p237 = pnand %p235, %p236
      %p238 = pneg %p237
      // Predicated region
      $region29: #{tpu_custom_call.1} parent=5 // pred_check
        _
      $region30: #{tpu_custom_call.1} parent=5 // pred_check_branch
        %240 = sbr.rel (%p237) target = $region32
      $region31: #{tpu_custom_call.1} parent=5 // pred_region
        %s241 = ssub.s32 %s23, 1
        %s242 = sand.u32 %s36, 1
        %s243 = scalar_lea.sflag [#allocation3], %s242
        %s244 = sand.u32 %s36, 1
        %s245 = smul.addr %s244, 16
        %s246 = scalar_lea.vmem [#allocation2], %s245
        // Predicated region
        $region33: #{tpu_custom_call.1} parent=31 // pred_check
          %p247 = pneg %p49
        $region34: #{tpu_custom_call.1} parent=31 // pred_check_branch
          %249 = sbr.rel (%p247) target = $region36
        $region35: #{tpu_custom_call.1} parent=31 // pred_region
          %250 = dma.done %s243, 256
        $region36: #{tpu_custom_call.1} parent=31 // pred_fallthru
          _
        %s251 = sand.u32 %s28, 1
        %s252 = scalar_lea.sflag [#allocation6], %s251
        %s253 = sand.u32 %s62, 1
        %s254 = smul.addr %s253, 16
        %s255 = scalar_lea.vmem [#allocation5], %s254
        // Predicated region
        $region37: #{tpu_custom_call.1} parent=31 // pred_check
          %p256 = pneg %p75
        $region38: #{tpu_custom_call.1} parent=31 // pred_check_branch
          %258 = sbr.rel (%p256) target = $region40
        $region39: #{tpu_custom_call.1} parent=31 // pred_region
          %259 = dma.done %s252, 256
        $region40: #{tpu_custom_call.1} parent=31 // pred_fallthru
          _
        %s260 = sand.u32 %s28, 1
        %s261 = scalar_lea.sflag [#allocation6], %s260
        %s262 = sand.u32 %s88, 1
        %s263 = smul.addr %s262, 256
        %s264 = scalar_lea.vmem [#allocation7], %s263
        // Predicated region
        $region41: #{tpu_custom_call.1} parent=31 // pred_check
          %p265 = pneg %p101
        $region42: #{tpu_custom_call.1} parent=31 // pred_check_branch
          %267 = sbr.rel (%p265) target = $region44
        $region43: #{tpu_custom_call.1} parent=31 // pred_region
          %268 = dma.done %s261, 4096
        $region44: #{tpu_custom_call.1} parent=31 // pred_fallthru
          _
        %s269 = sand.u32 %s36, 1
        %s270 = scalar_lea.sflag [#allocation3], %s269
        %s271 = sand.u32 %s36, 1
        %s272 = smul.addr %s271, 16
        %s273 = scalar_lea.vmem [#allocation2], %s272
        %p274 = pneg %p49
        %p275 = pneg %p46
        %s276 = sand.u32 %s28, 1
        %s277 = scalar_lea.sflag [#allocation6], %s276
        %s278 = sand.u32 %s62, 1
        %s279 = smul.addr %s278, 16
        %s280 = scalar_lea.vmem [#allocation5], %s279
        %p281 = pneg %p75
        %p282 = pneg %p72
        %s283 = sand.u32 %s28, 1
        %s284 = scalar_lea.sflag [#allocation6], %s283
        %s285 = sand.u32 %s88, 1
        %s286 = smul.addr %s285, 256
        %s287 = scalar_lea.vmem [#allocation7], %s286
        %p288 = pneg %p101
        %p289 = pneg %p98
        %p290 = pneg %p127
        %p291 = pneg %p124
        %s292 = sand.u32 %s114, 1
        %s293 = scalar_lea.sflag [#allocation4], %s292
        %s294 = sand.u32 %s114, 1
        %s295 = smul.addr %s294, 16
        %s296 = scalar_lea.vmem [#allocation8], %s295
        %p297 = pneg %p153
        %p298 = pneg %p150
        %s299 = sand.u32 %s140, 1
        %s300 = scalar_lea.sflag [#allocation10], %s299
        %s301 = sand.u32 %s140, 1
        %s302 = smul.addr %s301, 16
        %s303 = scalar_lea.vmem [#allocation9], %s302
        %v304 = vld [vmem:[%s255] sm:$0xff]
        %v305 = vld [vmem:[%s255 + $0x8] sm:$0xff]
        %v306 = vld [vmem:[%s264] sm:$0xff]
        %v307 = vld [vmem:[%s264 + $0x8] sm:$0xff]
        %v308 = vld [vmem:[%s264 + $0x10] sm:$0xff]
        %v309 = vld [vmem:[%s264 + $0x18] sm:$0xff]
        %v310 = vld [vmem:[%s264 + $0x20] sm:$0xff]
        %v311 = vld [vmem:[%s264 + $0x28] sm:$0xff]
        %v312 = vld [vmem:[%s264 + $0x30] sm:$0xff]
        %v313 = vld [vmem:[%s264 + $0x38] sm:$0xff]
        %v314 = vld [vmem:[%s264 + $0x40] sm:$0xff]
        %v315 = vld [vmem:[%s264 + $0x48] sm:$0xff]
        %v316 = vld [vmem:[%s264 + $0x50] sm:$0xff]
        %v317 = vld [vmem:[%s264 + $0x58] sm:$0xff]
        %v318 = vld [vmem:[%s264 + $0x60] sm:$0xff]
        %v319 = vld [vmem:[%s264 + $0x68] sm:$0xff]
        %v320 = vld [vmem:[%s264 + $0x70] sm:$0xff]
        %v321 = vld [vmem:[%s264 + $0x78] sm:$0xff]
        %v322 = vld [vmem:[%s264 + $0x80] sm:$0xff]
        %v323 = vld [vmem:[%s264 + $0x88] sm:$0xff]
        %v324 = vld [vmem:[%s264 + $0x90] sm:$0xff]
        %v325 = vld [vmem:[%s264 + $0x98] sm:$0xff]
        %v326 = vld [vmem:[%s264 + $0xa0] sm:$0xff]
        %v327 = vld [vmem:[%s264 + $0xa8] sm:$0xff]
        %v328 = vld [vmem:[%s264 + $0xb0] sm:$0xff]
        %v329 = vld [vmem:[%s264 + $0xb8] sm:$0xff]
        %v330 = vld [vmem:[%s264 + $0xc0] sm:$0xff]
        %v331 = vld [vmem:[%s264 + $0xc8] sm:$0xff]
        %v332 = vld [vmem:[%s264 + $0xd0] sm:$0xff]
        %v333 = vld [vmem:[%s264 + $0xd8] sm:$0xff]
        %v334 = vld [vmem:[%s264 + $0xe0] sm:$0xff]
        %v335 = vld [vmem:[%s264 + $0xe8] sm:$0xff]
        %v336 = vld [vmem:[%s264 + $0xf0] sm:$0xff]
        %v337 = vld [vmem:[%s264 + $0xf8] sm:$0xff]
        %v338 = vld [vmem:[%s246] sm:$0xff]
        %v339 = vld [vmem:[%s246 + $0x8] sm:$0xff]
        %v340 = vlaneseq
        %v341 = vshrl.u32 %v340, 7
        %v342 = vadd.s32 %v341, 8
        %v343 = vlaneseq
        %v344 = vand.u32 %v343, 127
        %vm345 = vcmp.lt.s32.totalorder %v341, 0
        %v346 = vsel %vm345, %v341, 0
        %vm347 = vcmp.lt.s32.totalorder %v342, 0
        %v348 = vsel %vm347, %v342, 0
        %vm349 = vcmp.lt.s32.totalorder %v341, 1
        %v350 = vsel %vm349, %v341, 1
        %vm351 = vcmp.lt.s32.totalorder %v342, 1
        %v352 = vsel %vm351, %v342, 1
        %vm353 = vcmp.lt.s32.totalorder %v341, 2
        %v354 = vsel %vm353, %v341, 2
        %vm355 = vcmp.lt.s32.totalorder %v342, 2
        %v356 = vsel %vm355, %v342, 2
        %vm357 = vcmp.lt.s32.totalorder %v341, 3
        %v358 = vsel %vm357, %v341, 3
        %vm359 = vcmp.lt.s32.totalorder %v342, 3
        %v360 = vsel %vm359, %v342, 3
        %vm361 = vcmp.lt.s32.totalorder %v341, 4
        %v362 = vsel %vm361, %v341, 4
        %vm363 = vcmp.lt.s32.totalorder %v342, 4
        %v364 = vsel %vm363, %v342, 4
        %vm365 = vcmp.lt.s32.totalorder %v341, 5
        %v366 = vsel %vm365, %v341, 5
        %vm367 = vcmp.lt.s32.totalorder %v342, 5
        %v368 = vsel %vm367, %v342, 5
        %vm369 = vcmp.lt.s32.totalorder %v341, 6
        %v370 = vsel %vm369, %v341, 6
        %vm371 = vcmp.lt.s32.totalorder %v342, 6
        %v372 = vsel %vm371, %v342, 6
        %vm373 = vcmp.lt.s32.totalorder %v341, 7
        %v374 = vsel %vm373, %v341, 7
        %vm375 = vcmp.lt.s32.totalorder %v342, 7
        %v376 = vsel %vm375, %v342, 7
        %vm377 = vcmp.lt.s32.totalorder %v341, 8
        %v378 = vsel %vm377, %v341, 8
        %vm379 = vcmp.lt.s32.totalorder %v342, 8
        %v380 = vsel %vm379, %v342, 8
        %vm381 = vcmp.lt.s32.totalorder %v341, 9
        %v382 = vsel %vm381, %v341, 9
        %vm383 = vcmp.lt.s32.totalorder %v342, 9
        %v384 = vsel %vm383, %v342, 9
        %vm385 = vcmp.lt.s32.totalorder %v341, 10
        %v386 = vsel %vm385, %v341, 10
        %vm387 = vcmp.lt.s32.totalorder %v342, 10
        %v388 = vsel %vm387, %v342, 10
        %vm389 = vcmp.lt.s32.totalorder %v341, 11
        %v390 = vsel %vm389, %v341, 11
        %vm391 = vcmp.lt.s32.totalorder %v342, 11
        %v392 = vsel %vm391, %v342, 11
        %vm393 = vcmp.lt.s32.totalorder %v341, 12
        %v394 = vsel %vm393, %v341, 12
        %vm395 = vcmp.lt.s32.totalorder %v342, 12
        %v396 = vsel %vm395, %v342, 12
        %vm397 = vcmp.lt.s32.totalorder %v341, 13
        %v398 = vsel %vm397, %v341, 13
        %vm399 = vcmp.lt.s32.totalorder %v342, 13
        %v400 = vsel %vm399, %v342, 13
        %vm401 = vcmp.lt.s32.totalorder %v341, 14
        %v402 = vsel %vm401, %v341, 14
        %vm403 = vcmp.lt.s32.totalorder %v342, 14
        %v404 = vsel %vm403, %v342, 14
        %vm405 = vcmp.lt.s32.totalorder %v341, 15
        %v406 = vsel %vm405, %v341, 15
        %vm407 = vcmp.lt.s32.totalorder %v342, 15
        %v408 = vsel %vm407, %v342, 15
        %vm409 = vcmp.gt.s32.totalorder %v341, 0
        %v410 = vsel %vm409, %v341, 0
        %vm411 = vcmp.gt.s32.totalorder %v342, 0
        %v412 = vsel %vm411, %v342, 0
        %vm413 = vcmp.gt.s32.totalorder %v341, 1
        %v414 = vsel %vm413, %v341, 1
        %vm415 = vcmp.gt.s32.totalorder %v342, 1
        %v416 = vsel %vm415, %v342, 1
        %vm417 = vcmp.gt.s32.totalorder %v341, 2
        %v418 = vsel %vm417, %v341, 2
        %vm419 = vcmp.gt.s32.totalorder %v342, 2
        %v420 = vsel %vm419, %v342, 2
        %vm421 = vcmp.gt.s32.totalorder %v341, 3
        %v422 = vsel %vm421, %v341, 3
        %vm423 = vcmp.gt.s32.totalorder %v342, 3
        %v424 = vsel %vm423, %v342, 3
        %vm425 = vcmp.gt.s32.totalorder %v341, 4
        %v426 = vsel %vm425, %v341, 4
        %vm427 = vcmp.gt.s32.totalorder %v342, 4
        %v428 = vsel %vm427, %v342, 4
        %vm429 = vcmp.gt.s32.totalorder %v341, 5
        %v430 = vsel %vm429, %v341, 5
        %vm431 = vcmp.gt.s32.totalorder %v342, 5
        %v432 = vsel %vm431, %v342, 5
        %vm433 = vcmp.gt.s32.totalorder %v341, 6
        %v434 = vsel %vm433, %v341, 6
        %vm435 = vcmp.gt.s32.totalorder %v342, 6
        %v436 = vsel %vm435, %v342, 6
        %vm437 = vcmp.gt.s32.totalorder %v341, 7
        %v438 = vsel %vm437, %v341, 7
        %vm439 = vcmp.gt.s32.totalorder %v342, 7
        %v440 = vsel %vm439, %v342, 7
        %vm441 = vcmp.gt.s32.totalorder %v341, 8
        %v442 = vsel %vm441, %v341, 8
        %vm443 = vcmp.gt.s32.totalorder %v342, 8
        %v444 = vsel %vm443, %v342, 8
        %vm445 = vcmp.gt.s32.totalorder %v341, 9
        %v446 = vsel %vm445, %v341, 9
        %vm447 = vcmp.gt.s32.totalorder %v342, 9
        %v448 = vsel %vm447, %v342, 9
        %vm449 = vcmp.gt.s32.totalorder %v341, 10
        %v450 = vsel %vm449, %v341, 10
        %vm451 = vcmp.gt.s32.totalorder %v342, 10
        %v452 = vsel %vm451, %v342, 10
        %vm453 = vcmp.gt.s32.totalorder %v341, 11
        %v454 = vsel %vm453, %v341, 11
        %vm455 = vcmp.gt.s32.totalorder %v342, 11
        %v456 = vsel %vm455, %v342, 11
        %vm457 = vcmp.gt.s32.totalorder %v341, 12
        %v458 = vsel %vm457, %v341, 12
        %vm459 = vcmp.gt.s32.totalorder %v342, 12
        %v460 = vsel %vm459, %v342, 12
        %vm461 = vcmp.gt.s32.totalorder %v341, 13
        %v462 = vsel %vm461, %v341, 13
        %vm463 = vcmp.gt.s32.totalorder %v342, 13
        %v464 = vsel %vm463, %v342, 13
        %vm465 = vcmp.gt.s32.totalorder %v341, 14
        %v466 = vsel %vm465, %v341, 14
        %vm467 = vcmp.gt.s32.totalorder %v342, 14
        %v468 = vsel %vm467, %v342, 14
        %vm469 = vcmp.gt.s32.totalorder %v341, 15
        %v470 = vsel %vm469, %v341, 15
        %vm471 = vcmp.gt.s32.totalorder %v342, 15
        %v472 = vsel %vm471, %v342, 15
        %vm473 = vcmp.ne.s32.totalorder %v346, %v344
        %vm474 = vcmp.ne.s32.totalorder %v348, %v344
        %vm475 = vcmp.ne.s32.totalorder %v350, %v344
        %vm476 = vcmp.ne.s32.totalorder %v352, %v344
        %vm477 = vcmp.ne.s32.totalorder %v354, %v344
        %vm478 = vcmp.ne.s32.totalorder %v356, %v344
        %vm479 = vcmp.ne.s32.totalorder %v358, %v344
        %vm480 = vcmp.ne.s32.totalorder %v360, %v344
        %vm481 = vcmp.ne.s32.totalorder %v362, %v344
        %vm482 = vcmp.ne.s32.totalorder %v364, %v344
        %vm483 = vcmp.ne.s32.totalorder %v366, %v344
        %vm484 = vcmp.ne.s32.totalorder %v368, %v344
        %vm485 = vcmp.ne.s32.totalorder %v370, %v344
        %vm486 = vcmp.ne.s32.totalorder %v372, %v344
        %vm487 = vcmp.ne.s32.totalorder %v374, %v344
        %vm488 = vcmp.ne.s32.totalorder %v376, %v344
        %vm489 = vcmp.ne.s32.totalorder %v378, %v344
        %vm490 = vcmp.ne.s32.totalorder %v380, %v344
        %vm491 = vcmp.ne.s32.totalorder %v382, %v344
        %vm492 = vcmp.ne.s32.totalorder %v384, %v344
        %vm493 = vcmp.ne.s32.totalorder %v386, %v344
        %vm494 = vcmp.ne.s32.totalorder %v388, %v344
        %vm495 = vcmp.ne.s32.totalorder %v390, %v344
        %vm496 = vcmp.ne.s32.totalorder %v392, %v344
        %vm497 = vcmp.ne.s32.totalorder %v394, %v344
        %vm498 = vcmp.ne.s32.totalorder %v396, %v344
        %vm499 = vcmp.ne.s32.totalorder %v398, %v344
        %vm500 = vcmp.ne.s32.totalorder %v400, %v344
        %vm501 = vcmp.ne.s32.totalorder %v402, %v344
        %vm502 = vcmp.ne.s32.totalorder %v404, %v344
        %vm503 = vcmp.ne.s32.totalorder %v406, %v344
        %vm504 = vcmp.ne.s32.totalorder %v408, %v344
        %vm505 = vcmp.ne.s32.totalorder %v410, %v344
        %vm506 = vcmp.ne.s32.totalorder %v412, %v344
        %vm507 = vcmp.ne.s32.totalorder %v414, %v344
        %vm508 = vcmp.ne.s32.totalorder %v416, %v344
        %vm509 = vcmp.ne.s32.totalorder %v418, %v344
        %vm510 = vcmp.ne.s32.totalorder %v420, %v344
        %vm511 = vcmp.ne.s32.totalorder %v422, %v344
        %vm512 = vcmp.ne.s32.totalorder %v424, %v344
        %vm513 = vcmp.ne.s32.totalorder %v426, %v344
        %vm514 = vcmp.ne.s32.totalorder %v428, %v344
        %vm515 = vcmp.ne.s32.totalorder %v430, %v344
        %vm516 = vcmp.ne.s32.totalorder %v432, %v344
        %vm517 = vcmp.ne.s32.totalorder %v434, %v344
        %vm518 = vcmp.ne.s32.totalorder %v436, %v344
        %vm519 = vcmp.ne.s32.totalorder %v438, %v344
        %vm520 = vcmp.ne.s32.totalorder %v440, %v344
        %vm521 = vcmp.ne.s32.totalorder %v442, %v344
        %vm522 = vcmp.ne.s32.totalorder %v444, %v344
        %vm523 = vcmp.ne.s32.totalorder %v446, %v344
        %vm524 = vcmp.ne.s32.totalorder %v448, %v344
        %vm525 = vcmp.ne.s32.totalorder %v450, %v344
        %vm526 = vcmp.ne.s32.totalorder %v452, %v344
        %vm527 = vcmp.ne.s32.totalorder %v454, %v344
        %vm528 = vcmp.ne.s32.totalorder %v456, %v344
        %vm529 = vcmp.ne.s32.totalorder %v458, %v344
        %vm530 = vcmp.ne.s32.totalorder %v460, %v344
        %vm531 = vcmp.ne.s32.totalorder %v462, %v344
        %vm532 = vcmp.ne.s32.totalorder %v464, %v344
        %vm533 = vcmp.ne.s32.totalorder %v466, %v344
        %vm534 = vcmp.ne.s32.totalorder %v468, %v344
        %vm535 = vcmp.ne.s32.totalorder %v470, %v344
        %vm536 = vcmp.ne.s32.totalorder %v472, %v344
        %vm537 = vmand %vm473, %vm505
        %vm538 = vmand %vm474, %vm506
        %vm539 = vmand %vm475, %vm507
        %vm540 = vmand %vm476, %vm508
        %vm541 = vmand %vm477, %vm509
        %vm542 = vmand %vm478, %vm510
        %vm543 = vmand %vm479, %vm511
        %vm544 = vmand %vm480, %vm512
        %vm545 = vmand %vm481, %vm513
        %vm546 = vmand %vm482, %vm514
        %vm547 = vmand %vm483, %vm515
        %vm548 = vmand %vm484, %vm516
        %vm549 = vmand %vm485, %vm517
        %vm550 = vmand %vm486, %vm518
        %vm551 = vmand %vm487, %vm519
        %vm552 = vmand %vm488, %vm520
        %vm553 = vmand %vm489, %vm521
        %vm554 = vmand %vm490, %vm522
        %vm555 = vmand %vm491, %vm523
        %vm556 = vmand %vm492, %vm524
        %vm557 = vmand %vm493, %vm525
        %vm558 = vmand %vm494, %vm526
        %vm559 = vmand %vm495, %vm527
        %vm560 = vmand %vm496, %vm528
        %vm561 = vmand %vm497, %vm529
        %vm562 = vmand %vm498, %vm530
        %vm563 = vmand %vm499, %vm531
        %vm564 = vmand %vm500, %vm532
        %vm565 = vmand %vm501, %vm533
        %vm566 = vmand %vm502, %vm534
        %vm567 = vmand %vm503, %vm535
        %vm568 = vmand %vm504, %vm536
        %v569 = vsel %vm537, %v306, 0.0
        %v570 = vsel %vm538, %v307, 0.0
        %v571 = vsel %vm539, %v308, 0.0
        %v572 = vsel %vm540, %v309, 0.0
        %v573 = vsel %vm541, %v310, 0.0
        %v574 = vsel %vm542, %v311, 0.0
        %v575 = vsel %vm543, %v312, 0.0
        %v576 = vsel %vm544, %v313, 0.0
        %v577 = vsel %vm545, %v314, 0.0
        %v578 = vsel %vm546, %v315, 0.0
        %v579 = vsel %vm547, %v316, 0.0
        %v580 = vsel %vm548, %v317, 0.0
        %v581 = vsel %vm549, %v318, 0.0
        %v582 = vsel %vm550, %v319, 0.0
        %v583 = vsel %vm551, %v320, 0.0
        %v584 = vsel %vm552, %v321, 0.0
        %v585 = vsel %vm553, %v322, 0.0
        %v586 = vsel %vm554, %v323, 0.0
        %v587 = vsel %vm555, %v324, 0.0
        %v588 = vsel %vm556, %v325, 0.0
        %v589 = vsel %vm557, %v326, 0.0
        %v590 = vsel %vm558, %v327, 0.0
        %v591 = vsel %vm559, %v328, 0.0
        %v592 = vsel %vm560, %v329, 0.0
        %v593 = vsel %vm561, %v330, 0.0
        %v594 = vsel %vm562, %v331, 0.0
        %v595 = vsel %vm563, %v332, 0.0
        %v596 = vsel %vm564, %v333, 0.0
        %v597 = vsel %vm565, %v334, 0.0
        %v598 = vsel %vm566, %v335, 0.0
        %v599 = vsel %vm567, %v336, 0.0
        %v600 = vsel %vm568, %v337, 0.0
        %v601 = vsub.f32 0.0, %v304
        %v602 = vsub.f32 0.0, %v305
        %v603 = vmul.f32 %v601, 1.442695
        %v604 = vpow.pop %v603
        %v605 = vmul.f32 %v602, 1.442695
        %v606 = vpow.pop %v605
        %v607 = vadd.f32 %v604, 1.0
        %v608 = vadd.f32 %v606, 1.0
        %v609 = vrcp.pop %v607
        %v610 = vmul.f32 1.0, %v609
        %v611 = vrcp.pop %v608
        %v612 = vmul.f32 1.0, %v611
        %v615 = vcombine.high %v610, %v610
        %v617 = vunpack.c.l.s4 1966171168
        %v618 = vunpack.c.0.s8 %v617
        %v619 = vlaneseq
        %v620 = vshrl.u32 %v619, 7
        %v621 = vsub.s32 %v618, %v620
        %v622 = vrot.slane %v610, %v621
        %v624 = vunpack.c.l.s4 1966171168
        %v625 = vunpack.c.0.s8 %v624
        %v626 = vlaneseq
        %v627 = vshrl.u32 %v626, 7
        %v628 = vsub.s32 %v625, %v627
        %v629 = vrot.slane %v615, %v628
        %v630 = vcombine.high %v622, %v622
        %v631 = vcombine.high %v629, %v629
        %v633 = vunpack.c.l.s4 1966171168
        %v634 = vunpack.c.0.s8 %v633
        %v635 = vlaneseq
        %v636 = vshrl.u32 %v635, 7
        %v637 = vsub.s32 %v634, %v636
        %v638 = vrot.slane %v622, %v637
        %v640 = vunpack.c.l.s4 1966171168
        %v641 = vunpack.c.0.s8 %v640
        %v642 = vlaneseq
        %v643 = vshrl.u32 %v642, 7
        %v644 = vsub.s32 %v641, %v643
        %v645 = vrot.slane %v629, %v644
        %v647 = vunpack.c.l.s4 1966171168
        %v648 = vunpack.c.0.s8 %v647
        %v649 = vlaneseq
        %v650 = vshrl.u32 %v649, 7
        %v651 = vsub.s32 %v648, %v650
        %v652 = vrot.slane %v630, %v651
        %v654 = vunpack.c.l.s4 1966171168
        %v655 = vunpack.c.0.s8 %v654
        %v656 = vlaneseq
        %v657 = vshrl.u32 %v656, 7
        %v658 = vsub.s32 %v655, %v657
        %v659 = vrot.slane %v631, %v658
        %v660 = vcombine.high %v638, %v638
        %v661 = vcombine.high %v645, %v645
        %v662 = vcombine.high %v652, %v652
        %v663 = vcombine.high %v659, %v659
        %v664 = vcombine.high %v612, %v612
        %v666 = vunpack.c.l.s4 1966171168
        %v667 = vunpack.c.0.s8 %v666
        %v668 = vlaneseq
        %v669 = vshrl.u32 %v668, 7
        %v670 = vsub.s32 %v667, %v669
        %v671 = vrot.slane %v612, %v670
        %v673 = vunpack.c.l.s4 1966171168
        %v674 = vunpack.c.0.s8 %v673
        %v675 = vlaneseq
        %v676 = vshrl.u32 %v675, 7
        %v677 = vsub.s32 %v674, %v676
        %v678 = vrot.slane %v664, %v677
        %v679 = vcombine.high %v671, %v671
        %v680 = vcombine.high %v678, %v678
        %v682 = vunpack.c.l.s4 1966171168
        %v683 = vunpack.c.0.s8 %v682
        %v684 = vlaneseq
        %v685 = vshrl.u32 %v684, 7
        %v686 = vsub.s32 %v683, %v685
        %v687 = vrot.slane %v671, %v686
        %v689 = vunpack.c.l.s4 1966171168
        %v690 = vunpack.c.0.s8 %v689
        %v691 = vlaneseq
        %v692 = vshrl.u32 %v691, 7
        %v693 = vsub.s32 %v690, %v692
        %v694 = vrot.slane %v678, %v693
        %v696 = vunpack.c.l.s4 1966171168
        %v697 = vunpack.c.0.s8 %v696
        %v698 = vlaneseq
        %v699 = vshrl.u32 %v698, 7
        %v700 = vsub.s32 %v697, %v699
        %v701 = vrot.slane %v679, %v700
        %v703 = vunpack.c.l.s4 1966171168
        %v704 = vunpack.c.0.s8 %v703
        %v705 = vlaneseq
        %v706 = vshrl.u32 %v705, 7
        %v707 = vsub.s32 %v704, %v706
        %v708 = vrot.slane %v680, %v707
        %v709 = vcombine.high %v687, %v687
        %v710 = vcombine.high %v694, %v694
        %v711 = vcombine.high %v701, %v701
        %v712 = vcombine.high %v708, %v708
        %v713 = vlaneseq
        %v714 = vshrl.u32 %v713, 7
        %v715 = vsub.s32 0, %v714
        %v716 = vrot.slane %v638, %v715
        %v717 = vlaneseq
        %v718 = vshrl.u32 %v717, 7
        %v719 = vsub.s32 0, %v718
        %v720 = vrot.slane %v652, %v719
        %v721 = vlaneseq
        %v722 = vshrl.u32 %v721, 7
        %v723 = vsub.s32 0, %v722
        %v724 = vrot.slane %v660, %v723
        %v725 = vlaneseq
        %v726 = vshrl.u32 %v725, 7
        %v727 = vsub.s32 0, %v726
        %v728 = vrot.slane %v662, %v727
        %v729 = vlaneseq
        %v730 = vshrl.u32 %v729, 7
        %v731 = vsub.s32 0, %v730
        %v732 = vrot.slane %v645, %v731
        %v733 = vlaneseq
        %v734 = vshrl.u32 %v733, 7
        %v735 = vsub.s32 0, %v734
        %v736 = vrot.slane %v659, %v735
        %v737 = vlaneseq
        %v738 = vshrl.u32 %v737, 7
        %v739 = vsub.s32 0, %v738
        %v740 = vrot.slane %v661, %v739
        %v741 = vlaneseq
        %v742 = vshrl.u32 %v741, 7
        %v743 = vsub.s32 0, %v742
        %v744 = vrot.slane %v663, %v743
        %v745 = vlaneseq
        %v746 = vshrl.u32 %v745, 7
        %v747 = vsub.s32 0, %v746
        %v748 = vrot.slane %v687, %v747
        %v749 = vlaneseq
        %v750 = vshrl.u32 %v749, 7
        %v751 = vsub.s32 0, %v750
        %v752 = vrot.slane %v701, %v751
        %v753 = vlaneseq
        %v754 = vshrl.u32 %v753, 7
        %v755 = vsub.s32 0, %v754
        %v756 = vrot.slane %v709, %v755
        %v757 = vlaneseq
        %v758 = vshrl.u32 %v757, 7
        %v759 = vsub.s32 0, %v758
        %v760 = vrot.slane %v711, %v759
        %v761 = vlaneseq
        %v762 = vshrl.u32 %v761, 7
        %v763 = vsub.s32 0, %v762
        %v764 = vrot.slane %v694, %v763
        %v765 = vlaneseq
        %v766 = vshrl.u32 %v765, 7
        %v767 = vsub.s32 0, %v766
        %v768 = vrot.slane %v708, %v767
        %v769 = vlaneseq
        %v770 = vshrl.u32 %v769, 7
        %v771 = vsub.s32 0, %v770
        %v772 = vrot.slane %v710, %v771
        %v773 = vlaneseq
        %v774 = vshrl.u32 %v773, 7
        %v775 = vsub.s32 0, %v774
        %v776 = vrot.slane %v712, %v775
        %v793 = vmul.f32 %v716, %v569
        %v794 = vmul.f32 %v716, %v570
        %v795 = vmul.f32 %v720, %v571
        %v796 = vmul.f32 %v720, %v572
        %v797 = vmul.f32 %v724, %v573
        %v798 = vmul.f32 %v724, %v574
        %v799 = vmul.f32 %v728, %v575
        %v800 = vmul.f32 %v728, %v576
        %v801 = vmul.f32 %v732, %v577
        %v802 = vmul.f32 %v732, %v578
        %v803 = vmul.f32 %v736, %v579
        %v804 = vmul.f32 %v736, %v580
        %v805 = vmul.f32 %v740, %v581
        %v806 = vmul.f32 %v740, %v582
        %v807 = vmul.f32 %v744, %v583
        %v808 = vmul.f32 %v744, %v584
        %v809 = vmul.f32 %v748, %v585
        %v810 = vmul.f32 %v748, %v586
        %v811 = vmul.f32 %v752, %v587
        %v812 = vmul.f32 %v752, %v588
        %v813 = vmul.f32 %v756, %v589
        %v814 = vmul.f32 %v756, %v590
        %v815 = vmul.f32 %v760, %v591
        %v816 = vmul.f32 %v760, %v592
        %v817 = vmul.f32 %v764, %v593
        %v818 = vmul.f32 %v764, %v594
        %v819 = vmul.f32 %v768, %v595
        %v820 = vmul.f32 %v768, %v596
        %v821 = vmul.f32 %v772, %v597
        %v822 = vmul.f32 %v772, %v598
        %v823 = vmul.f32 %v776, %v599
        %v824 = vmul.f32 %v776, %v600
        %vm825 = vcmask 130048
        %v826 = vsel %vm825, %v793, 0.0
        %827 = vadd.xlane.f32.xlu0 %v826
        %v828 = vpop.xlane.xlu0 %827
        %v829 = vsel %vm825, %v794, 0.0
        %830 = vadd.xlane.f32.xlu0 %v829
        %v831 = vpop.xlane.xlu0 %830
        %v832 = vsel %vm825, %v795, 0.0
        %833 = vadd.xlane.f32.xlu0 %v832
        %v834 = vpop.xlane.xlu0 %833
        %v835 = vsel %vm825, %v796, 0.0
        %836 = vadd.xlane.f32.xlu0 %v835
        %v837 = vpop.xlane.xlu0 %836
        %v838 = vsel %vm825, %v797, 0.0
        %839 = vadd.xlane.f32.xlu0 %v838
        %v840 = vpop.xlane.xlu0 %839
        %v841 = vsel %vm825, %v798, 0.0
        %842 = vadd.xlane.f32.xlu0 %v841
        %v843 = vpop.xlane.xlu0 %842
        %v844 = vsel %vm825, %v799, 0.0
        %845 = vadd.xlane.f32.xlu0 %v844
        %v846 = vpop.xlane.xlu0 %845
        %v847 = vsel %vm825, %v800, 0.0
        %848 = vadd.xlane.f32.xlu0 %v847
        %v849 = vpop.xlane.xlu0 %848
        %v850 = vsel %vm825, %v801, 0.0
        %851 = vadd.xlane.f32.xlu0 %v850
        %v852 = vpop.xlane.xlu0 %851
        %v853 = vsel %vm825, %v802, 0.0
        %854 = vadd.xlane.f32.xlu0 %v853
        %v855 = vpop.xlane.xlu0 %854
        %v856 = vsel %vm825, %v803, 0.0
        %857 = vadd.xlane.f32.xlu0 %v856
        %v858 = vpop.xlane.xlu0 %857
        %v859 = vsel %vm825, %v804, 0.0
        %860 = vadd.xlane.f32.xlu0 %v859
        %v861 = vpop.xlane.xlu0 %860
        %v862 = vsel %vm825, %v805, 0.0
        %863 = vadd.xlane.f32.xlu0 %v862
        %v864 = vpop.xlane.xlu0 %863
        %v865 = vsel %vm825, %v806, 0.0
        %866 = vadd.xlane.f32.xlu0 %v865
        %v867 = vpop.xlane.xlu0 %866
        %v868 = vsel %vm825, %v807, 0.0
        %869 = vadd.xlane.f32.xlu0 %v868
        %v870 = vpop.xlane.xlu0 %869
        %v871 = vsel %vm825, %v808, 0.0
        %872 = vadd.xlane.f32.xlu0 %v871
        %v873 = vpop.xlane.xlu0 %872
        %v874 = vsel %vm825, %v809, 0.0
        %875 = vadd.xlane.f32.xlu0 %v874
        %v876 = vpop.xlane.xlu0 %875
        %v877 = vsel %vm825, %v810, 0.0
        %878 = vadd.xlane.f32.xlu0 %v877
        %v879 = vpop.xlane.xlu0 %878
        %v880 = vsel %vm825, %v811, 0.0
        %881 = vadd.xlane.f32.xlu0 %v880
        %v882 = vpop.xlane.xlu0 %881
        %v883 = vsel %vm825, %v812, 0.0
        %884 = vadd.xlane.f32.xlu0 %v883
        %v885 = vpop.xlane.xlu0 %884
        %v886 = vsel %vm825, %v813, 0.0
        %887 = vadd.xlane.f32.xlu0 %v886
        %v888 = vpop.xlane.xlu0 %887
        %v889 = vsel %vm825, %v814, 0.0
        %890 = vadd.xlane.f32.xlu0 %v889
        %v891 = vpop.xlane.xlu0 %890
        %v892 = vsel %vm825, %v815, 0.0
        %893 = vadd.xlane.f32.xlu0 %v892
        %v894 = vpop.xlane.xlu0 %893
        %v895 = vsel %vm825, %v816, 0.0
        %896 = vadd.xlane.f32.xlu0 %v895
        %v897 = vpop.xlane.xlu0 %896
        %v898 = vsel %vm825, %v817, 0.0
        %899 = vadd.xlane.f32.xlu0 %v898
        %v900 = vpop.xlane.xlu0 %899
        %v901 = vsel %vm825, %v818, 0.0
        %902 = vadd.xlane.f32.xlu0 %v901
        %v903 = vpop.xlane.xlu0 %902
        %v904 = vsel %vm825, %v819, 0.0
        %905 = vadd.xlane.f32.xlu0 %v904
        %v906 = vpop.xlane.xlu0 %905
        %v907 = vsel %vm825, %v820, 0.0
        %908 = vadd.xlane.f32.xlu0 %v907
        %v909 = vpop.xlane.xlu0 %908
        %v910 = vsel %vm825, %v821, 0.0
        %911 = vadd.xlane.f32.xlu0 %v910
        %v912 = vpop.xlane.xlu0 %911
        %v913 = vsel %vm825, %v822, 0.0
        %914 = vadd.xlane.f32.xlu0 %v913
        %v915 = vpop.xlane.xlu0 %914
        %v916 = vsel %vm825, %v823, 0.0
        %917 = vadd.xlane.f32.xlu0 %v916
        %v918 = vpop.xlane.xlu0 %917
        %v919 = vsel %vm825, %v824, 0.0
        %920 = vadd.xlane.f32.xlu0 %v919
        %v921 = vpop.xlane.xlu0 %920
        %v954 = vlaneseq
        %v955 = vshrl.u32 %v954, 7
        %v956 = vsub.s32 %v344, %v955
        %v957 = vrot.slane %v828, %v956
        %v958 = vadd.s32 %v344, 4294967288
        %v959 = vlaneseq
        %v960 = vshrl.u32 %v959, 7
        %v961 = vsub.s32 %v958, %v960
        %v962 = vrot.slane %v831, %v961
        %vm963 = vcmask 130112
        %v964 = vsel %vm963, %v962, %v957
        %v965 = vlaneseq
        %v966 = vshrl.u32 %v965, 7
        %v967 = vsub.s32 %v344, %v966
        %v968 = vrot.slane %v834, %v967
        %v969 = vlaneseq
        %v970 = vshrl.u32 %v969, 7
        %v971 = vsub.s32 %v958, %v970
        %v972 = vrot.slane %v837, %v971
        %v973 = vsel %vm963, %v972, %v968
        %v974 = vlaneseq
        %v975 = vshrl.u32 %v974, 7
        %v976 = vsub.s32 %v344, %v975
        %v977 = vrot.slane %v840, %v976
        %v978 = vlaneseq
        %v979 = vshrl.u32 %v978, 7
        %v980 = vsub.s32 %v958, %v979
        %v981 = vrot.slane %v843, %v980
        %v982 = vsel %vm963, %v981, %v977
        %v983 = vlaneseq
        %v984 = vshrl.u32 %v983, 7
        %v985 = vsub.s32 %v344, %v984
        %v986 = vrot.slane %v846, %v985
        %v987 = vlaneseq
        %v988 = vshrl.u32 %v987, 7
        %v989 = vsub.s32 %v958, %v988
        %v990 = vrot.slane %v849, %v989
        %v991 = vsel %vm963, %v990, %v986
        %v992 = vlaneseq
        %v993 = vshrl.u32 %v992, 7
        %v994 = vsub.s32 %v344, %v993
        %v995 = vrot.slane %v852, %v994
        %v996 = vlaneseq
        %v997 = vshrl.u32 %v996, 7
        %v998 = vsub.s32 %v958, %v997
        %v999 = vrot.slane %v855, %v998
        %v1000 = vsel %vm963, %v999, %v995
        %v1001 = vlaneseq
        %v1002 = vshrl.u32 %v1001, 7
        %v1003 = vsub.s32 %v344, %v1002
        %v1004 = vrot.slane %v858, %v1003
        %v1005 = vlaneseq
        %v1006 = vshrl.u32 %v1005, 7
        %v1007 = vsub.s32 %v958, %v1006
        %v1008 = vrot.slane %v861, %v1007
        %v1009 = vsel %vm963, %v1008, %v1004
        %v1010 = vlaneseq
        %v1011 = vshrl.u32 %v1010, 7
        %v1012 = vsub.s32 %v344, %v1011
        %v1013 = vrot.slane %v864, %v1012
        %v1014 = vlaneseq
        %v1015 = vshrl.u32 %v1014, 7
        %v1016 = vsub.s32 %v958, %v1015
        %v1017 = vrot.slane %v867, %v1016
        %v1018 = vsel %vm963, %v1017, %v1013
        %v1019 = vlaneseq
        %v1020 = vshrl.u32 %v1019, 7
        %v1021 = vsub.s32 %v344, %v1020
        %v1022 = vrot.slane %v870, %v1021
        %v1023 = vlaneseq
        %v1024 = vshrl.u32 %v1023, 7
        %v1025 = vsub.s32 %v958, %v1024
        %v1026 = vrot.slane %v873, %v1025
        %v1027 = vsel %vm963, %v1026, %v1022
        %v1028 = vlaneseq
        %v1029 = vshrl.u32 %v1028, 7
        %v1030 = vsub.s32 %v344, %v1029
        %v1031 = vrot.slane %v876, %v1030
        %v1032 = vlaneseq
        %v1033 = vshrl.u32 %v1032, 7
        %v1034 = vsub.s32 %v958, %v1033
        %v1035 = vrot.slane %v879, %v1034
        %v1036 = vsel %vm963, %v1035, %v1031
        %v1037 = vlaneseq
        %v1038 = vshrl.u32 %v1037, 7
        %v1039 = vsub.s32 %v344, %v1038
        %v1040 = vrot.slane %v882, %v1039
        %v1041 = vlaneseq
        %v1042 = vshrl.u32 %v1041, 7
        %v1043 = vsub.s32 %v958, %v1042
        %v1044 = vrot.slane %v885, %v1043
        %v1045 = vsel %vm963, %v1044, %v1040
        %v1046 = vlaneseq
        %v1047 = vshrl.u32 %v1046, 7
        %v1048 = vsub.s32 %v344, %v1047
        %v1049 = vrot.slane %v888, %v1048
        %v1050 = vlaneseq
        %v1051 = vshrl.u32 %v1050, 7
        %v1052 = vsub.s32 %v958, %v1051
        %v1053 = vrot.slane %v891, %v1052
        %v1054 = vsel %vm963, %v1053, %v1049
        %v1055 = vlaneseq
        %v1056 = vshrl.u32 %v1055, 7
        %v1057 = vsub.s32 %v344, %v1056
        %v1058 = vrot.slane %v894, %v1057
        %v1059 = vlaneseq
        %v1060 = vshrl.u32 %v1059, 7
        %v1061 = vsub.s32 %v958, %v1060
        %v1062 = vrot.slane %v897, %v1061
        %v1063 = vsel %vm963, %v1062, %v1058
        %v1064 = vlaneseq
        %v1065 = vshrl.u32 %v1064, 7
        %v1066 = vsub.s32 %v344, %v1065
        %v1067 = vrot.slane %v900, %v1066
        %v1068 = vlaneseq
        %v1069 = vshrl.u32 %v1068, 7
        %v1070 = vsub.s32 %v958, %v1069
        %v1071 = vrot.slane %v903, %v1070
        %v1072 = vsel %vm963, %v1071, %v1067
        %v1073 = vlaneseq
        %v1074 = vshrl.u32 %v1073, 7
        %v1075 = vsub.s32 %v344, %v1074
        %v1076 = vrot.slane %v906, %v1075
        %v1077 = vlaneseq
        %v1078 = vshrl.u32 %v1077, 7
        %v1079 = vsub.s32 %v958, %v1078
        %v1080 = vrot.slane %v909, %v1079
        %v1081 = vsel %vm963, %v1080, %v1076
        %v1082 = vlaneseq
        %v1083 = vshrl.u32 %v1082, 7
        %v1084 = vsub.s32 %v344, %v1083
        %v1085 = vrot.slane %v912, %v1084
        %v1086 = vlaneseq
        %v1087 = vshrl.u32 %v1086, 7
        %v1088 = vsub.s32 %v958, %v1087
        %v1089 = vrot.slane %v915, %v1088
        %v1090 = vsel %vm963, %v1089, %v1085
        %v1091 = vlaneseq
        %v1092 = vshrl.u32 %v1091, 7
        %v1093 = vsub.s32 %v344, %v1092
        %v1094 = vrot.slane %v918, %v1093
        %v1095 = vlaneseq
        %v1096 = vshrl.u32 %v1095, 7
        %v1097 = vsub.s32 %v958, %v1096
        %v1098 = vrot.slane %v921, %v1097
        %v1099 = vsel %vm963, %v1098, %v1094
        %vm1100 = vcmask 1041409
        %v1101 = vsel %vm1100, %v973, %v964
        %vm1102 = vcmask 1042434
        %v1103 = vsel %vm1102, %v982, %v1101
        %vm1104 = vcmask 1043459
        %v1105 = vsel %vm1104, %v991, %v1103
        %vm1106 = vcmask 1044484
        %v1107 = vsel %vm1106, %v1000, %v1105
        %vm1108 = vcmask 1045509
        %v1109 = vsel %vm1108, %v1009, %v1107
        %vm1110 = vcmask 1046534
        %v1111 = vsel %vm1110, %v1018, %v1109
        %vm1112 = vcmask 1047559
        %v1113 = vsel %vm1112, %v1027, %v1111
        %v1114 = vsel %vm1100, %v1045, %v1036
        %v1115 = vsel %vm1102, %v1054, %v1114
        %v1116 = vsel %vm1104, %v1063, %v1115
        %v1117 = vsel %vm1106, %v1072, %v1116
        %v1118 = vsel %vm1108, %v1081, %v1117
        %v1119 = vsel %vm1110, %v1090, %v1118
        %v1120 = vsel %vm1112, %v1099, %v1119
        %v1123 = vmul.f32 %v338, %v1113
        %v1124 = vmul.f32 %v339, %v1120
        %v1125 = vadd.f32 %v304, %v1123
        %v1126 = vadd.f32 %v305, %v1124
        %v1127 = vsub.f32 0.0, %v1125
        %v1128 = vsub.f32 0.0, %v1126
        %v1129 = vmul.f32 %v1127, 1.442695
        %v1130 = vpow.pop %v1129
        %v1131 = vmul.f32 %v1128, 1.442695
        %v1132 = vpow.pop %v1131
        %v1133 = vadd.f32 %v1130, 1.0
        %v1134 = vadd.f32 %v1132, 1.0
        %v1135 = vrcp.pop %v1133
        %v1136 = vmul.f32 1.0, %v1135
        %v1137 = vrcp.pop %v1134
        %v1138 = vmul.f32 1.0, %v1137
        %v1141 = vcombine.high %v1136, %v1136
        %v1143 = vunpack.c.l.s4 1966171168
        %v1144 = vunpack.c.0.s8 %v1143
        %v1145 = vlaneseq
        %v1146 = vshrl.u32 %v1145, 7
        %v1147 = vsub.s32 %v1144, %v1146
        %v1148 = vrot.slane %v1136, %v1147
        %v1150 = vunpack.c.l.s4 1966171168
        %v1151 = vunpack.c.0.s8 %v1150
        %v1152 = vlaneseq
        %v1153 = vshrl.u32 %v1152, 7
        %v1154 = vsub.s32 %v1151, %v1153
        %v1155 = vrot.slane %v1141, %v1154
        %v1156 = vcombine.high %v1148, %v1148
        %v1157 = vcombine.high %v1155, %v1155
        %v1159 = vunpack.c.l.s4 1966171168
        %v1160 = vunpack.c.0.s8 %v1159
        %v1161 = vlaneseq
        %v1162 = vshrl.u32 %v1161, 7
        %v1163 = vsub.s32 %v1160, %v1162
        %v1164 = vrot.slane %v1148, %v1163
        %v1166 = vunpack.c.l.s4 1966171168
        %v1167 = vunpack.c.0.s8 %v1166
        %v1168 = vlaneseq
        %v1169 = vshrl.u32 %v1168, 7
        %v1170 = vsub.s32 %v1167, %v1169
        %v1171 = vrot.slane %v1155, %v1170
        %v1173 = vunpack.c.l.s4 1966171168
        %v1174 = vunpack.c.0.s8 %v1173
        %v1175 = vlaneseq
        %v1176 = vshrl.u32 %v1175, 7
        %v1177 = vsub.s32 %v1174, %v1176
        %v1178 = vrot.slane %v1156, %v1177
        %v1180 = vunpack.c.l.s4 1966171168
        %v1181 = vunpack.c.0.s8 %v1180
        %v1182 = vlaneseq
        %v1183 = vshrl.u32 %v1182, 7
        %v1184 = vsub.s32 %v1181, %v1183
        %v1185 = vrot.slane %v1157, %v1184
        %v1186 = vcombine.high %v1164, %v1164
        %v1187 = vcombine.high %v1171, %v1171
        %v1188 = vcombine.high %v1178, %v1178
        %v1189 = vcombine.high %v1185, %v1185
        %v1190 = vcombine.high %v1138, %v1138
        %v1192 = vunpack.c.l.s4 1966171168
        %v1193 = vunpack.c.0.s8 %v1192
        %v1194 = vlaneseq
        %v1195 = vshrl.u32 %v1194, 7
        %v1196 = vsub.s32 %v1193, %v1195
        %v1197 = vrot.slane %v1138, %v1196
        %v1199 = vunpack.c.l.s4 1966171168
        %v1200 = vunpack.c.0.s8 %v1199
        %v1201 = vlaneseq
        %v1202 = vshrl.u32 %v1201, 7
        %v1203 = vsub.s32 %v1200, %v1202
        %v1204 = vrot.slane %v1190, %v1203
        %v1205 = vcombine.high %v1197, %v1197
        %v1206 = vcombine.high %v1204, %v1204
        %v1208 = vunpack.c.l.s4 1966171168
        %v1209 = vunpack.c.0.s8 %v1208
        %v1210 = vlaneseq
        %v1211 = vshrl.u32 %v1210, 7
        %v1212 = vsub.s32 %v1209, %v1211
        %v1213 = vrot.slane %v1197, %v1212
        %v1215 = vunpack.c.l.s4 1966171168
        %v1216 = vunpack.c.0.s8 %v1215
        %v1217 = vlaneseq
        %v1218 = vshrl.u32 %v1217, 7
        %v1219 = vsub.s32 %v1216, %v1218
        %v1220 = vrot.slane %v1204, %v1219
        %v1222 = vunpack.c.l.s4 1966171168
        %v1223 = vunpack.c.0.s8 %v1222
        %v1224 = vlaneseq
        %v1225 = vshrl.u32 %v1224, 7
        %v1226 = vsub.s32 %v1223, %v1225
        %v1227 = vrot.slane %v1205, %v1226
        %v1229 = vunpack.c.l.s4 1966171168
        %v1230 = vunpack.c.0.s8 %v1229
        %v1231 = vlaneseq
        %v1232 = vshrl.u32 %v1231, 7
        %v1233 = vsub.s32 %v1230, %v1232
        %v1234 = vrot.slane %v1206, %v1233
        %v1235 = vcombine.high %v1213, %v1213
        %v1236 = vcombine.high %v1220, %v1220
        %v1237 = vcombine.high %v1227, %v1227
        %v1238 = vcombine.high %v1234, %v1234
        %v1239 = vlaneseq
        %v1240 = vshrl.u32 %v1239, 7
        %v1241 = vsub.s32 0, %v1240
        %v1242 = vrot.slane %v1164, %v1241
        %v1243 = vlaneseq
        %v1244 = vshrl.u32 %v1243, 7
        %v1245 = vsub.s32 0, %v1244
        %v1246 = vrot.slane %v1178, %v1245
        %v1247 = vlaneseq
        %v1248 = vshrl.u32 %v1247, 7
        %v1249 = vsub.s32 0, %v1248
        %v1250 = vrot.slane %v1186, %v1249
        %v1251 = vlaneseq
        %v1252 = vshrl.u32 %v1251, 7
        %v1253 = vsub.s32 0, %v1252
        %v1254 = vrot.slane %v1188, %v1253
        %v1255 = vlaneseq
        %v1256 = vshrl.u32 %v1255, 7
        %v1257 = vsub.s32 0, %v1256
        %v1258 = vrot.slane %v1171, %v1257
        %v1259 = vlaneseq
        %v1260 = vshrl.u32 %v1259, 7
        %v1261 = vsub.s32 0, %v1260
        %v1262 = vrot.slane %v1185, %v1261
        %v1263 = vlaneseq
        %v1264 = vshrl.u32 %v1263, 7
        %v1265 = vsub.s32 0, %v1264
        %v1266 = vrot.slane %v1187, %v1265
        %v1267 = vlaneseq
        %v1268 = vshrl.u32 %v1267, 7
        %v1269 = vsub.s32 0, %v1268
        %v1270 = vrot.slane %v1189, %v1269
        %v1271 = vlaneseq
        %v1272 = vshrl.u32 %v1271, 7
        %v1273 = vsub.s32 0, %v1272
        %v1274 = vrot.slane %v1213, %v1273
        %v1275 = vlaneseq
        %v1276 = vshrl.u32 %v1275, 7
        %v1277 = vsub.s32 0, %v1276
        %v1278 = vrot.slane %v1227, %v1277
        %v1279 = vlaneseq
        %v1280 = vshrl.u32 %v1279, 7
        %v1281 = vsub.s32 0, %v1280
        %v1282 = vrot.slane %v1235, %v1281
        %v1283 = vlaneseq
        %v1284 = vshrl.u32 %v1283, 7
        %v1285 = vsub.s32 0, %v1284
        %v1286 = vrot.slane %v1237, %v1285
        %v1287 = vlaneseq
        %v1288 = vshrl.u32 %v1287, 7
        %v1289 = vsub.s32 0, %v1288
        %v1290 = vrot.slane %v1220, %v1289
        %v1291 = vlaneseq
        %v1292 = vshrl.u32 %v1291, 7
        %v1293 = vsub.s32 0, %v1292
        %v1294 = vrot.slane %v1234, %v1293
        %v1295 = vlaneseq
        %v1296 = vshrl.u32 %v1295, 7
        %v1297 = vsub.s32 0, %v1296
        %v1298 = vrot.slane %v1236, %v1297
        %v1299 = vlaneseq
        %v1300 = vshrl.u32 %v1299, 7
        %v1301 = vsub.s32 0, %v1300
        %v1302 = vrot.slane %v1238, %v1301
        %v1319 = vmul.f32 %v1242, %v569
        %v1320 = vmul.f32 %v1242, %v570
        %v1321 = vmul.f32 %v1246, %v571
        %v1322 = vmul.f32 %v1246, %v572
        %v1323 = vmul.f32 %v1250, %v573
        %v1324 = vmul.f32 %v1250, %v574
        %v1325 = vmul.f32 %v1254, %v575
        %v1326 = vmul.f32 %v1254, %v576
        %v1327 = vmul.f32 %v1258, %v577
        %v1328 = vmul.f32 %v1258, %v578
        %v1329 = vmul.f32 %v1262, %v579
        %v1330 = vmul.f32 %v1262, %v580
        %v1331 = vmul.f32 %v1266, %v581
        %v1332 = vmul.f32 %v1266, %v582
        %v1333 = vmul.f32 %v1270, %v583
        %v1334 = vmul.f32 %v1270, %v584
        %v1335 = vmul.f32 %v1274, %v585
        %v1336 = vmul.f32 %v1274, %v586
        %v1337 = vmul.f32 %v1278, %v587
        %v1338 = vmul.f32 %v1278, %v588
        %v1339 = vmul.f32 %v1282, %v589
        %v1340 = vmul.f32 %v1282, %v590
        %v1341 = vmul.f32 %v1286, %v591
        %v1342 = vmul.f32 %v1286, %v592
        %v1343 = vmul.f32 %v1290, %v593
        %v1344 = vmul.f32 %v1290, %v594
        %v1345 = vmul.f32 %v1294, %v595
        %v1346 = vmul.f32 %v1294, %v596
        %v1347 = vmul.f32 %v1298, %v597
        %v1348 = vmul.f32 %v1298, %v598
        %v1349 = vmul.f32 %v1302, %v599
        %v1350 = vmul.f32 %v1302, %v600
        %v1351 = vsel %vm825, %v1319, 0.0
        %1352 = vadd.xlane.f32.xlu0 %v1351
        %v1353 = vpop.xlane.xlu0 %1352
        %v1354 = vsel %vm825, %v1320, 0.0
        %1355 = vadd.xlane.f32.xlu0 %v1354
        %v1356 = vpop.xlane.xlu0 %1355
        %v1357 = vsel %vm825, %v1321, 0.0
        %1358 = vadd.xlane.f32.xlu0 %v1357
        %v1359 = vpop.xlane.xlu0 %1358
        %v1360 = vsel %vm825, %v1322, 0.0
        %1361 = vadd.xlane.f32.xlu0 %v1360
        %v1362 = vpop.xlane.xlu0 %1361
        %v1363 = vsel %vm825, %v1323, 0.0
        %1364 = vadd.xlane.f32.xlu0 %v1363
        %v1365 = vpop.xlane.xlu0 %1364
        %v1366 = vsel %vm825, %v1324, 0.0
        %1367 = vadd.xlane.f32.xlu0 %v1366
        %v1368 = vpop.xlane.xlu0 %1367
        %v1369 = vsel %vm825, %v1325, 0.0
        %1370 = vadd.xlane.f32.xlu0 %v1369
        %v1371 = vpop.xlane.xlu0 %1370
        %v1372 = vsel %vm825, %v1326, 0.0
        %1373 = vadd.xlane.f32.xlu0 %v1372
        %v1374 = vpop.xlane.xlu0 %1373
        %v1375 = vsel %vm825, %v1327, 0.0
        %1376 = vadd.xlane.f32.xlu0 %v1375
        %v1377 = vpop.xlane.xlu0 %1376
        %v1378 = vsel %vm825, %v1328, 0.0
        %1379 = vadd.xlane.f32.xlu0 %v1378
        %v1380 = vpop.xlane.xlu0 %1379
        %v1381 = vsel %vm825, %v1329, 0.0
        %1382 = vadd.xlane.f32.xlu0 %v1381
        %v1383 = vpop.xlane.xlu0 %1382
        %v1384 = vsel %vm825, %v1330, 0.0
        %1385 = vadd.xlane.f32.xlu0 %v1384
        %v1386 = vpop.xlane.xlu0 %1385
        %v1387 = vsel %vm825, %v1331, 0.0
        %1388 = vadd.xlane.f32.xlu0 %v1387
        %v1389 = vpop.xlane.xlu0 %1388
        %v1390 = vsel %vm825, %v1332, 0.0
        %1391 = vadd.xlane.f32.xlu0 %v1390
        %v1392 = vpop.xlane.xlu0 %1391
        %v1393 = vsel %vm825, %v1333, 0.0
        %1394 = vadd.xlane.f32.xlu0 %v1393
        %v1395 = vpop.xlane.xlu0 %1394
        %v1396 = vsel %vm825, %v1334, 0.0
        %1397 = vadd.xlane.f32.xlu0 %v1396
        %v1398 = vpop.xlane.xlu0 %1397
        %v1399 = vsel %vm825, %v1335, 0.0
        %1400 = vadd.xlane.f32.xlu0 %v1399
        %v1401 = vpop.xlane.xlu0 %1400
        %v1402 = vsel %vm825, %v1336, 0.0
        %1403 = vadd.xlane.f32.xlu0 %v1402
        %v1404 = vpop.xlane.xlu0 %1403
        %v1405 = vsel %vm825, %v1337, 0.0
        %1406 = vadd.xlane.f32.xlu0 %v1405
        %v1407 = vpop.xlane.xlu0 %1406
        %v1408 = vsel %vm825, %v1338, 0.0
        %1409 = vadd.xlane.f32.xlu0 %v1408
        %v1410 = vpop.xlane.xlu0 %1409
        %v1411 = vsel %vm825, %v1339, 0.0
        %1412 = vadd.xlane.f32.xlu0 %v1411
        %v1413 = vpop.xlane.xlu0 %1412
        %v1414 = vsel %vm825, %v1340, 0.0
        %1415 = vadd.xlane.f32.xlu0 %v1414
        %v1416 = vpop.xlane.xlu0 %1415
        %v1417 = vsel %vm825, %v1341, 0.0
        %1418 = vadd.xlane.f32.xlu0 %v1417
        %v1419 = vpop.xlane.xlu0 %1418
        %v1420 = vsel %vm825, %v1342, 0.0
        %1421 = vadd.xlane.f32.xlu0 %v1420
        %v1422 = vpop.xlane.xlu0 %1421
        %v1423 = vsel %vm825, %v1343, 0.0
        %1424 = vadd.xlane.f32.xlu0 %v1423
        %v1425 = vpop.xlane.xlu0 %1424
        %v1426 = vsel %vm825, %v1344, 0.0
        %1427 = vadd.xlane.f32.xlu0 %v1426
        %v1428 = vpop.xlane.xlu0 %1427
        %v1429 = vsel %vm825, %v1345, 0.0
        %1430 = vadd.xlane.f32.xlu0 %v1429
        %v1431 = vpop.xlane.xlu0 %1430
        %v1432 = vsel %vm825, %v1346, 0.0
        %1433 = vadd.xlane.f32.xlu0 %v1432
        %v1434 = vpop.xlane.xlu0 %1433
        %v1435 = vsel %vm825, %v1347, 0.0
        %1436 = vadd.xlane.f32.xlu0 %v1435
        %v1437 = vpop.xlane.xlu0 %1436
        %v1438 = vsel %vm825, %v1348, 0.0
        %1439 = vadd.xlane.f32.xlu0 %v1438
        %v1440 = vpop.xlane.xlu0 %1439
        %v1441 = vsel %vm825, %v1349, 0.0
        %1442 = vadd.xlane.f32.xlu0 %v1441
        %v1443 = vpop.xlane.xlu0 %1442
        %v1444 = vsel %vm825, %v1350, 0.0
        %1445 = vadd.xlane.f32.xlu0 %v1444
        %v1446 = vpop.xlane.xlu0 %1445
        %v1479 = vlaneseq
        %v1480 = vshrl.u32 %v1479, 7
        %v1481 = vsub.s32 %v344, %v1480
        %v1482 = vrot.slane %v1353, %v1481
        %v1483 = vlaneseq
        %v1484 = vshrl.u32 %v1483, 7
        %v1485 = vsub.s32 %v958, %v1484
        %v1486 = vrot.slane %v1356, %v1485
        %v1487 = vsel %vm963, %v1486, %v1482
        %v1488 = vlaneseq
        %v1489 = vshrl.u32 %v1488, 7
        %v1490 = vsub.s32 %v344, %v1489
        %v1491 = vrot.slane %v1359, %v1490
        %v1492 = vlaneseq
        %v1493 = vshrl.u32 %v1492, 7
        %v1494 = vsub.s32 %v958, %v1493
        %v1495 = vrot.slane %v1362, %v1494
        %v1496 = vsel %vm963, %v1495, %v1491
        %v1497 = vlaneseq
        %v1498 = vshrl.u32 %v1497, 7
        %v1499 = vsub.s32 %v344, %v1498
        %v1500 = vrot.slane %v1365, %v1499
        %v1501 = vlaneseq
        %v1502 = vshrl.u32 %v1501, 7
        %v1503 = vsub.s32 %v958, %v1502
        %v1504 = vrot.slane %v1368, %v1503
        %v1505 = vsel %vm963, %v1504, %v1500
        %v1506 = vlaneseq
        %v1507 = vshrl.u32 %v1506, 7
        %v1508 = vsub.s32 %v344, %v1507
        %v1509 = vrot.slane %v1371, %v1508
        %v1510 = vlaneseq
        %v1511 = vshrl.u32 %v1510, 7
        %v1512 = vsub.s32 %v958, %v1511
        %v1513 = vrot.slane %v1374, %v1512
        %v1514 = vsel %vm963, %v1513, %v1509
        %v1515 = vlaneseq
        %v1516 = vshrl.u32 %v1515, 7
        %v1517 = vsub.s32 %v344, %v1516
        %v1518 = vrot.slane %v1377, %v1517
        %v1519 = vlaneseq
        %v1520 = vshrl.u32 %v1519, 7
        %v1521 = vsub.s32 %v958, %v1520
        %v1522 = vrot.slane %v1380, %v1521
        %v1523 = vsel %vm963, %v1522, %v1518
        %v1524 = vlaneseq
        %v1525 = vshrl.u32 %v1524, 7
        %v1526 = vsub.s32 %v344, %v1525
        %v1527 = vrot.slane %v1383, %v1526
        %v1528 = vlaneseq
        %v1529 = vshrl.u32 %v1528, 7
        %v1530 = vsub.s32 %v958, %v1529
        %v1531 = vrot.slane %v1386, %v1530
        %v1532 = vsel %vm963, %v1531, %v1527
        %v1533 = vlaneseq
        %v1534 = vshrl.u32 %v1533, 7
        %v1535 = vsub.s32 %v344, %v1534
        %v1536 = vrot.slane %v1389, %v1535
        %v1537 = vlaneseq
        %v1538 = vshrl.u32 %v1537, 7
        %v1539 = vsub.s32 %v958, %v1538
        %v1540 = vrot.slane %v1392, %v1539
        %v1541 = vsel %vm963, %v1540, %v1536
        %v1542 = vlaneseq
        %v1543 = vshrl.u32 %v1542, 7
        %v1544 = vsub.s32 %v344, %v1543
        %v1545 = vrot.slane %v1395, %v1544
        %v1546 = vlaneseq
        %v1547 = vshrl.u32 %v1546, 7
        %v1548 = vsub.s32 %v958, %v1547
        %v1549 = vrot.slane %v1398, %v1548
        %v1550 = vsel %vm963, %v1549, %v1545
        %v1551 = vlaneseq
        %v1552 = vshrl.u32 %v1551, 7
        %v1553 = vsub.s32 %v344, %v1552
        %v1554 = vrot.slane %v1401, %v1553
        %v1555 = vlaneseq
        %v1556 = vshrl.u32 %v1555, 7
        %v1557 = vsub.s32 %v958, %v1556
        %v1558 = vrot.slane %v1404, %v1557
        %v1559 = vsel %vm963, %v1558, %v1554
        %v1560 = vlaneseq
        %v1561 = vshrl.u32 %v1560, 7
        %v1562 = vsub.s32 %v344, %v1561
        %v1563 = vrot.slane %v1407, %v1562
        %v1564 = vlaneseq
        %v1565 = vshrl.u32 %v1564, 7
        %v1566 = vsub.s32 %v958, %v1565
        %v1567 = vrot.slane %v1410, %v1566
        %v1568 = vsel %vm963, %v1567, %v1563
        %v1569 = vlaneseq
        %v1570 = vshrl.u32 %v1569, 7
        %v1571 = vsub.s32 %v344, %v1570
        %v1572 = vrot.slane %v1413, %v1571
        %v1573 = vlaneseq
        %v1574 = vshrl.u32 %v1573, 7
        %v1575 = vsub.s32 %v958, %v1574
        %v1576 = vrot.slane %v1416, %v1575
        %v1577 = vsel %vm963, %v1576, %v1572
        %v1578 = vlaneseq
        %v1579 = vshrl.u32 %v1578, 7
        %v1580 = vsub.s32 %v344, %v1579
        %v1581 = vrot.slane %v1419, %v1580
        %v1582 = vlaneseq
        %v1583 = vshrl.u32 %v1582, 7
        %v1584 = vsub.s32 %v958, %v1583
        %v1585 = vrot.slane %v1422, %v1584
        %v1586 = vsel %vm963, %v1585, %v1581
        %v1587 = vlaneseq
        %v1588 = vshrl.u32 %v1587, 7
        %v1589 = vsub.s32 %v344, %v1588
        %v1590 = vrot.slane %v1425, %v1589
        %v1591 = vlaneseq
        %v1592 = vshrl.u32 %v1591, 7
        %v1593 = vsub.s32 %v958, %v1592
        %v1594 = vrot.slane %v1428, %v1593
        %v1595 = vsel %vm963, %v1594, %v1590
        %v1596 = vlaneseq
        %v1597 = vshrl.u32 %v1596, 7
        %v1598 = vsub.s32 %v344, %v1597
        %v1599 = vrot.slane %v1431, %v1598
        %v1600 = vlaneseq
        %v1601 = vshrl.u32 %v1600, 7
        %v1602 = vsub.s32 %v958, %v1601
        %v1603 = vrot.slane %v1434, %v1602
        %v1604 = vsel %vm963, %v1603, %v1599
        %v1605 = vlaneseq
        %v1606 = vshrl.u32 %v1605, 7
        %v1607 = vsub.s32 %v344, %v1606
        %v1608 = vrot.slane %v1437, %v1607
        %v1609 = vlaneseq
        %v1610 = vshrl.u32 %v1609, 7
        %v1611 = vsub.s32 %v958, %v1610
        %v1612 = vrot.slane %v1440, %v1611
        %v1613 = vsel %vm963, %v1612, %v1608
        %v1614 = vlaneseq
        %v1615 = vshrl.u32 %v1614, 7
        %v1616 = vsub.s32 %v344, %v1615
        %v1617 = vrot.slane %v1443, %v1616
        %v1618 = vlaneseq
        %v1619 = vshrl.u32 %v1618, 7
        %v1620 = vsub.s32 %v958, %v1619
        %v1621 = vrot.slane %v1446, %v1620
        %v1622 = vsel %vm963, %v1621, %v1617
        %v1623 = vsel %vm1100, %v1496, %v1487
        %v1624 = vsel %vm1102, %v1505, %v1623
        %v1625 = vsel %vm1104, %v1514, %v1624
        %v1626 = vsel %vm1106, %v1523, %v1625
        %v1627 = vsel %vm1108, %v1532, %v1626
        %v1628 = vsel %vm1110, %v1541, %v1627
        %v1629 = vsel %vm1112, %v1550, %v1628
        %v1630 = vsel %vm1100, %v1568, %v1559
        %v1631 = vsel %vm1102, %v1577, %v1630
        %v1632 = vsel %vm1104, %v1586, %v1631
        %v1633 = vsel %vm1106, %v1595, %v1632
        %v1634 = vsel %vm1108, %v1604, %v1633
        %v1635 = vsel %vm1110, %v1613, %v1634
        %v1636 = vsel %vm1112, %v1622, %v1635
        %v1639 = vmul.f32 %v338, %v1629
        %v1640 = vmul.f32 %v339, %v1636
        %v1641 = vadd.f32 %v304, %v1639
        %v1642 = vadd.f32 %v305, %v1640
        %v1643 = vsub.f32 0.0, %v1641
        %v1644 = vsub.f32 0.0, %v1642
        %v1645 = vmul.f32 %v1643, 1.442695
        %v1646 = vpow.pop %v1645
        %v1647 = vmul.f32 %v1644, 1.442695
        %v1648 = vpow.pop %v1647
        %v1649 = vadd.f32 %v1646, 1.0
        %v1650 = vadd.f32 %v1648, 1.0
        %v1651 = vrcp.pop %v1649
        %v1652 = vmul.f32 1.0, %v1651
        %v1653 = vrcp.pop %v1650
        %v1654 = vmul.f32 1.0, %v1653
        %v1657 = vcombine.high %v1652, %v1652
        %v1659 = vunpack.c.l.s4 1966171168
        %v1660 = vunpack.c.0.s8 %v1659
        %v1661 = vlaneseq
        %v1662 = vshrl.u32 %v1661, 7
        %v1663 = vsub.s32 %v1660, %v1662
        %v1664 = vrot.slane %v1652, %v1663
        %v1666 = vunpack.c.l.s4 1966171168
        %v1667 = vunpack.c.0.s8 %v1666
        %v1668 = vlaneseq
        %v1669 = vshrl.u32 %v1668, 7
        %v1670 = vsub.s32 %v1667, %v1669
        %v1671 = vrot.slane %v1657, %v1670
        %v1672 = vcombine.high %v1664, %v1664
        %v1673 = vcombine.high %v1671, %v1671
        %v1675 = vunpack.c.l.s4 1966171168
        %v1676 = vunpack.c.0.s8 %v1675
        %v1677 = vlaneseq
        %v1678 = vshrl.u32 %v1677, 7
        %v1679 = vsub.s32 %v1676, %v1678
        %v1680 = vrot.slane %v1664, %v1679
        %v1682 = vunpack.c.l.s4 1966171168
        %v1683 = vunpack.c.0.s8 %v1682
        %v1684 = vlaneseq
        %v1685 = vshrl.u32 %v1684, 7
        %v1686 = vsub.s32 %v1683, %v1685
        %v1687 = vrot.slane %v1671, %v1686
        %v1689 = vunpack.c.l.s4 1966171168
        %v1690 = vunpack.c.0.s8 %v1689
        %v1691 = vlaneseq
        %v1692 = vshrl.u32 %v1691, 7
        %v1693 = vsub.s32 %v1690, %v1692
        %v1694 = vrot.slane %v1672, %v1693
        %v1696 = vunpack.c.l.s4 1966171168
        %v1697 = vunpack.c.0.s8 %v1696
        %v1698 = vlaneseq
        %v1699 = vshrl.u32 %v1698, 7
        %v1700 = vsub.s32 %v1697, %v1699
        %v1701 = vrot.slane %v1673, %v1700
        %v1702 = vcombine.high %v1680, %v1680
        %v1703 = vcombine.high %v1687, %v1687
        %v1704 = vcombine.high %v1694, %v1694
        %v1705 = vcombine.high %v1701, %v1701
        %v1706 = vcombine.high %v1654, %v1654
        %v1708 = vunpack.c.l.s4 1966171168
        %v1709 = vunpack.c.0.s8 %v1708
        %v1710 = vlaneseq
        %v1711 = vshrl.u32 %v1710, 7
        %v1712 = vsub.s32 %v1709, %v1711
        %v1713 = vrot.slane %v1654, %v1712
        %v1715 = vunpack.c.l.s4 1966171168
        %v1716 = vunpack.c.0.s8 %v1715
        %v1717 = vlaneseq
        %v1718 = vshrl.u32 %v1717, 7
        %v1719 = vsub.s32 %v1716, %v1718
        %v1720 = vrot.slane %v1706, %v1719
        %v1721 = vcombine.high %v1713, %v1713
        %v1722 = vcombine.high %v1720, %v1720
        %v1724 = vunpack.c.l.s4 1966171168
        %v1725 = vunpack.c.0.s8 %v1724
        %v1726 = vlaneseq
        %v1727 = vshrl.u32 %v1726, 7
        %v1728 = vsub.s32 %v1725, %v1727
        %v1729 = vrot.slane %v1713, %v1728
        %v1731 = vunpack.c.l.s4 1966171168
        %v1732 = vunpack.c.0.s8 %v1731
        %v1733 = vlaneseq
        %v1734 = vshrl.u32 %v1733, 7
        %v1735 = vsub.s32 %v1732, %v1734
        %v1736 = vrot.slane %v1720, %v1735
        %v1738 = vunpack.c.l.s4 1966171168
        %v1739 = vunpack.c.0.s8 %v1738
        %v1740 = vlaneseq
        %v1741 = vshrl.u32 %v1740, 7
        %v1742 = vsub.s32 %v1739, %v1741
        %v1743 = vrot.slane %v1721, %v1742
        %v1745 = vunpack.c.l.s4 1966171168
        %v1746 = vunpack.c.0.s8 %v1745
        %v1747 = vlaneseq
        %v1748 = vshrl.u32 %v1747, 7
        %v1749 = vsub.s32 %v1746, %v1748
        %v1750 = vrot.slane %v1722, %v1749
        %v1751 = vcombine.high %v1729, %v1729
        %v1752 = vcombine.high %v1736, %v1736
        %v1753 = vcombine.high %v1743, %v1743
        %v1754 = vcombine.high %v1750, %v1750
        %v1755 = vlaneseq
        %v1756 = vshrl.u32 %v1755, 7
        %v1757 = vsub.s32 0, %v1756
        %v1758 = vrot.slane %v1680, %v1757
        %v1759 = vlaneseq
        %v1760 = vshrl.u32 %v1759, 7
        %v1761 = vsub.s32 0, %v1760
        %v1762 = vrot.slane %v1694, %v1761
        %v1763 = vlaneseq
        %v1764 = vshrl.u32 %v1763, 7
        %v1765 = vsub.s32 0, %v1764
        %v1766 = vrot.slane %v1702, %v1765
        %v1767 = vlaneseq
        %v1768 = vshrl.u32 %v1767, 7
        %v1769 = vsub.s32 0, %v1768
        %v1770 = vrot.slane %v1704, %v1769
        %v1771 = vlaneseq
        %v1772 = vshrl.u32 %v1771, 7
        %v1773 = vsub.s32 0, %v1772
        %v1774 = vrot.slane %v1687, %v1773
        %v1775 = vlaneseq
        %v1776 = vshrl.u32 %v1775, 7
        %v1777 = vsub.s32 0, %v1776
        %v1778 = vrot.slane %v1701, %v1777
        %v1779 = vlaneseq
        %v1780 = vshrl.u32 %v1779, 7
        %v1781 = vsub.s32 0, %v1780
        %v1782 = vrot.slane %v1703, %v1781
        %v1783 = vlaneseq
        %v1784 = vshrl.u32 %v1783, 7
        %v1785 = vsub.s32 0, %v1784
        %v1786 = vrot.slane %v1705, %v1785
        %v1787 = vlaneseq
        %v1788 = vshrl.u32 %v1787, 7
        %v1789 = vsub.s32 0, %v1788
        %v1790 = vrot.slane %v1729, %v1789
        %v1791 = vlaneseq
        %v1792 = vshrl.u32 %v1791, 7
        %v1793 = vsub.s32 0, %v1792
        %v1794 = vrot.slane %v1743, %v1793
        %v1795 = vlaneseq
        %v1796 = vshrl.u32 %v1795, 7
        %v1797 = vsub.s32 0, %v1796
        %v1798 = vrot.slane %v1751, %v1797
        %v1799 = vlaneseq
        %v1800 = vshrl.u32 %v1799, 7
        %v1801 = vsub.s32 0, %v1800
        %v1802 = vrot.slane %v1753, %v1801
        %v1803 = vlaneseq
        %v1804 = vshrl.u32 %v1803, 7
        %v1805 = vsub.s32 0, %v1804
        %v1806 = vrot.slane %v1736, %v1805
        %v1807 = vlaneseq
        %v1808 = vshrl.u32 %v1807, 7
        %v1809 = vsub.s32 0, %v1808
        %v1810 = vrot.slane %v1750, %v1809
        %v1811 = vlaneseq
        %v1812 = vshrl.u32 %v1811, 7
        %v1813 = vsub.s32 0, %v1812
        %v1814 = vrot.slane %v1752, %v1813
        %v1815 = vlaneseq
        %v1816 = vshrl.u32 %v1815, 7
        %v1817 = vsub.s32 0, %v1816
        %v1818 = vrot.slane %v1754, %v1817
        %v1835 = vmul.f32 %v1758, %v569
        %v1836 = vmul.f32 %v1758, %v570
        %v1837 = vmul.f32 %v1762, %v571
        %v1838 = vmul.f32 %v1762, %v572
        %v1839 = vmul.f32 %v1766, %v573
        %v1840 = vmul.f32 %v1766, %v574
        %v1841 = vmul.f32 %v1770, %v575
        %v1842 = vmul.f32 %v1770, %v576
        %v1843 = vmul.f32 %v1774, %v577
        %v1844 = vmul.f32 %v1774, %v578
        %v1845 = vmul.f32 %v1778, %v579
        %v1846 = vmul.f32 %v1778, %v580
        %v1847 = vmul.f32 %v1782, %v581
        %v1848 = vmul.f32 %v1782, %v582
        %v1849 = vmul.f32 %v1786, %v583
        %v1850 = vmul.f32 %v1786, %v584
        %v1851 = vmul.f32 %v1790, %v585
        %v1852 = vmul.f32 %v1790, %v586
        %v1853 = vmul.f32 %v1794, %v587
        %v1854 = vmul.f32 %v1794, %v588
        %v1855 = vmul.f32 %v1798, %v589
        %v1856 = vmul.f32 %v1798, %v590
        %v1857 = vmul.f32 %v1802, %v591
        %v1858 = vmul.f32 %v1802, %v592
        %v1859 = vmul.f32 %v1806, %v593
        %v1860 = vmul.f32 %v1806, %v594
        %v1861 = vmul.f32 %v1810, %v595
        %v1862 = vmul.f32 %v1810, %v596
        %v1863 = vmul.f32 %v1814, %v597
        %v1864 = vmul.f32 %v1814, %v598
        %v1865 = vmul.f32 %v1818, %v599
        %v1866 = vmul.f32 %v1818, %v600
        %v1867 = vsel %vm825, %v1835, 0.0
        %1868 = vadd.xlane.f32.xlu0 %v1867
        %v1869 = vpop.xlane.xlu0 %1868
        %v1870 = vsel %vm825, %v1836, 0.0
        %1871 = vadd.xlane.f32.xlu0 %v1870
        %v1872 = vpop.xlane.xlu0 %1871
        %v1873 = vsel %vm825, %v1837, 0.0
        %1874 = vadd.xlane.f32.xlu0 %v1873
        %v1875 = vpop.xlane.xlu0 %1874
        %v1876 = vsel %vm825, %v1838, 0.0
        %1877 = vadd.xlane.f32.xlu0 %v1876
        %v1878 = vpop.xlane.xlu0 %1877
        %v1879 = vsel %vm825, %v1839, 0.0
        %1880 = vadd.xlane.f32.xlu0 %v1879
        %v1881 = vpop.xlane.xlu0 %1880
        %v1882 = vsel %vm825, %v1840, 0.0
        %1883 = vadd.xlane.f32.xlu0 %v1882
        %v1884 = vpop.xlane.xlu0 %1883
        %v1885 = vsel %vm825, %v1841, 0.0
        %1886 = vadd.xlane.f32.xlu0 %v1885
        %v1887 = vpop.xlane.xlu0 %1886
        %v1888 = vsel %vm825, %v1842, 0.0
        %1889 = vadd.xlane.f32.xlu0 %v1888
        %v1890 = vpop.xlane.xlu0 %1889
        %v1891 = vsel %vm825, %v1843, 0.0
        %1892 = vadd.xlane.f32.xlu0 %v1891
        %v1893 = vpop.xlane.xlu0 %1892
        %v1894 = vsel %vm825, %v1844, 0.0
        %1895 = vadd.xlane.f32.xlu0 %v1894
        %v1896 = vpop.xlane.xlu0 %1895
        %v1897 = vsel %vm825, %v1845, 0.0
        %1898 = vadd.xlane.f32.xlu0 %v1897
        %v1899 = vpop.xlane.xlu0 %1898
        %v1900 = vsel %vm825, %v1846, 0.0
        %1901 = vadd.xlane.f32.xlu0 %v1900
        %v1902 = vpop.xlane.xlu0 %1901
        %v1903 = vsel %vm825, %v1847, 0.0
        %1904 = vadd.xlane.f32.xlu0 %v1903
        %v1905 = vpop.xlane.xlu0 %1904
        %v1906 = vsel %vm825, %v1848, 0.0
        %1907 = vadd.xlane.f32.xlu0 %v1906
        %v1908 = vpop.xlane.xlu0 %1907
        %v1909 = vsel %vm825, %v1849, 0.0
        %1910 = vadd.xlane.f32.xlu0 %v1909
        %v1911 = vpop.xlane.xlu0 %1910
        %v1912 = vsel %vm825, %v1850, 0.0
        %1913 = vadd.xlane.f32.xlu0 %v1912
        %v1914 = vpop.xlane.xlu0 %1913
        %v1915 = vsel %vm825, %v1851, 0.0
        %1916 = vadd.xlane.f32.xlu0 %v1915
        %v1917 = vpop.xlane.xlu0 %1916
        %v1918 = vsel %vm825, %v1852, 0.0
        %1919 = vadd.xlane.f32.xlu0 %v1918
        %v1920 = vpop.xlane.xlu0 %1919
        %v1921 = vsel %vm825, %v1853, 0.0
        %1922 = vadd.xlane.f32.xlu0 %v1921
        %v1923 = vpop.xlane.xlu0 %1922
        %v1924 = vsel %vm825, %v1854, 0.0
        %1925 = vadd.xlane.f32.xlu0 %v1924
        %v1926 = vpop.xlane.xlu0 %1925
        %v1927 = vsel %vm825, %v1855, 0.0
        %1928 = vadd.xlane.f32.xlu0 %v1927
        %v1929 = vpop.xlane.xlu0 %1928
        %v1930 = vsel %vm825, %v1856, 0.0
        %1931 = vadd.xlane.f32.xlu0 %v1930
        %v1932 = vpop.xlane.xlu0 %1931
        %v1933 = vsel %vm825, %v1857, 0.0
        %1934 = vadd.xlane.f32.xlu0 %v1933
        %v1935 = vpop.xlane.xlu0 %1934
        %v1936 = vsel %vm825, %v1858, 0.0
        %1937 = vadd.xlane.f32.xlu0 %v1936
        %v1938 = vpop.xlane.xlu0 %1937
        %v1939 = vsel %vm825, %v1859, 0.0
        %1940 = vadd.xlane.f32.xlu0 %v1939
        %v1941 = vpop.xlane.xlu0 %1940
        %v1942 = vsel %vm825, %v1860, 0.0
        %1943 = vadd.xlane.f32.xlu0 %v1942
        %v1944 = vpop.xlane.xlu0 %1943
        %v1945 = vsel %vm825, %v1861, 0.0
        %1946 = vadd.xlane.f32.xlu0 %v1945
        %v1947 = vpop.xlane.xlu0 %1946
        %v1948 = vsel %vm825, %v1862, 0.0
        %1949 = vadd.xlane.f32.xlu0 %v1948
        %v1950 = vpop.xlane.xlu0 %1949
        %v1951 = vsel %vm825, %v1863, 0.0
        %1952 = vadd.xlane.f32.xlu0 %v1951
        %v1953 = vpop.xlane.xlu0 %1952
        %v1954 = vsel %vm825, %v1864, 0.0
        %1955 = vadd.xlane.f32.xlu0 %v1954
        %v1956 = vpop.xlane.xlu0 %1955
        %v1957 = vsel %vm825, %v1865, 0.0
        %1958 = vadd.xlane.f32.xlu0 %v1957
        %v1959 = vpop.xlane.xlu0 %1958
        %v1960 = vsel %vm825, %v1866, 0.0
        %1961 = vadd.xlane.f32.xlu0 %v1960
        %v1962 = vpop.xlane.xlu0 %1961
        %v1995 = vlaneseq
        %v1996 = vshrl.u32 %v1995, 7
        %v1997 = vsub.s32 %v344, %v1996
        %v1998 = vrot.slane %v1869, %v1997
        %v1999 = vlaneseq
        %v2000 = vshrl.u32 %v1999, 7
        %v2001 = vsub.s32 %v958, %v2000
        %v2002 = vrot.slane %v1872, %v2001
        %v2003 = vsel %vm963, %v2002, %v1998
        %v2004 = vlaneseq
        %v2005 = vshrl.u32 %v2004, 7
        %v2006 = vsub.s32 %v344, %v2005
        %v2007 = vrot.slane %v1875, %v2006
        %v2008 = vlaneseq
        %v2009 = vshrl.u32 %v2008, 7
        %v2010 = vsub.s32 %v958, %v2009
        %v2011 = vrot.slane %v1878, %v2010
        %v2012 = vsel %vm963, %v2011, %v2007
        %v2013 = vlaneseq
        %v2014 = vshrl.u32 %v2013, 7
        %v2015 = vsub.s32 %v344, %v2014
        %v2016 = vrot.slane %v1881, %v2015
        %v2017 = vlaneseq
        %v2018 = vshrl.u32 %v2017, 7
        %v2019 = vsub.s32 %v958, %v2018
        %v2020 = vrot.slane %v1884, %v2019
        %v2021 = vsel %vm963, %v2020, %v2016
        %v2022 = vlaneseq
        %v2023 = vshrl.u32 %v2022, 7
        %v2024 = vsub.s32 %v344, %v2023
        %v2025 = vrot.slane %v1887, %v2024
        %v2026 = vlaneseq
        %v2027 = vshrl.u32 %v2026, 7
        %v2028 = vsub.s32 %v958, %v2027
        %v2029 = vrot.slane %v1890, %v2028
        %v2030 = vsel %vm963, %v2029, %v2025
        %v2031 = vlaneseq
        %v2032 = vshrl.u32 %v2031, 7
        %v2033 = vsub.s32 %v344, %v2032
        %v2034 = vrot.slane %v1893, %v2033
        %v2035 = vlaneseq
        %v2036 = vshrl.u32 %v2035, 7
        %v2037 = vsub.s32 %v958, %v2036
        %v2038 = vrot.slane %v1896, %v2037
        %v2039 = vsel %vm963, %v2038, %v2034
        %v2040 = vlaneseq
        %v2041 = vshrl.u32 %v2040, 7
        %v2042 = vsub.s32 %v344, %v2041
        %v2043 = vrot.slane %v1899, %v2042
        %v2044 = vlaneseq
        %v2045 = vshrl.u32 %v2044, 7
        %v2046 = vsub.s32 %v958, %v2045
        %v2047 = vrot.slane %v1902, %v2046
        %v2048 = vsel %vm963, %v2047, %v2043
        %v2049 = vlaneseq
        %v2050 = vshrl.u32 %v2049, 7
        %v2051 = vsub.s32 %v344, %v2050
        %v2052 = vrot.slane %v1905, %v2051
        %v2053 = vlaneseq
        %v2054 = vshrl.u32 %v2053, 7
        %v2055 = vsub.s32 %v958, %v2054
        %v2056 = vrot.slane %v1908, %v2055
        %v2057 = vsel %vm963, %v2056, %v2052
        %v2058 = vlaneseq
        %v2059 = vshrl.u32 %v2058, 7
        %v2060 = vsub.s32 %v344, %v2059
        %v2061 = vrot.slane %v1911, %v2060
        %v2062 = vlaneseq
        %v2063 = vshrl.u32 %v2062, 7
        %v2064 = vsub.s32 %v958, %v2063
        %v2065 = vrot.slane %v1914, %v2064
        %v2066 = vsel %vm963, %v2065, %v2061
        %v2067 = vlaneseq
        %v2068 = vshrl.u32 %v2067, 7
        %v2069 = vsub.s32 %v344, %v2068
        %v2070 = vrot.slane %v1917, %v2069
        %v2071 = vlaneseq
        %v2072 = vshrl.u32 %v2071, 7
        %v2073 = vsub.s32 %v958, %v2072
        %v2074 = vrot.slane %v1920, %v2073
        %v2075 = vsel %vm963, %v2074, %v2070
        %v2076 = vlaneseq
        %v2077 = vshrl.u32 %v2076, 7
        %v2078 = vsub.s32 %v344, %v2077
        %v2079 = vrot.slane %v1923, %v2078
        %v2080 = vlaneseq
        %v2081 = vshrl.u32 %v2080, 7
        %v2082 = vsub.s32 %v958, %v2081
        %v2083 = vrot.slane %v1926, %v2082
        %v2084 = vsel %vm963, %v2083, %v2079
        %v2085 = vlaneseq
        %v2086 = vshrl.u32 %v2085, 7
        %v2087 = vsub.s32 %v344, %v2086
        %v2088 = vrot.slane %v1929, %v2087
        %v2089 = vlaneseq
        %v2090 = vshrl.u32 %v2089, 7
        %v2091 = vsub.s32 %v958, %v2090
        %v2092 = vrot.slane %v1932, %v2091
        %v2093 = vsel %vm963, %v2092, %v2088
        %v2094 = vlaneseq
        %v2095 = vshrl.u32 %v2094, 7
        %v2096 = vsub.s32 %v344, %v2095
        %v2097 = vrot.slane %v1935, %v2096
        %v2098 = vlaneseq
        %v2099 = vshrl.u32 %v2098, 7
        %v2100 = vsub.s32 %v958, %v2099
        %v2101 = vrot.slane %v1938, %v2100
        %v2102 = vsel %vm963, %v2101, %v2097
        %v2103 = vlaneseq
        %v2104 = vshrl.u32 %v2103, 7
        %v2105 = vsub.s32 %v344, %v2104
        %v2106 = vrot.slane %v1941, %v2105
        %v2107 = vlaneseq
        %v2108 = vshrl.u32 %v2107, 7
        %v2109 = vsub.s32 %v958, %v2108
        %v2110 = vrot.slane %v1944, %v2109
        %v2111 = vsel %vm963, %v2110, %v2106
        %v2112 = vlaneseq
        %v2113 = vshrl.u32 %v2112, 7
        %v2114 = vsub.s32 %v344, %v2113
        %v2115 = vrot.slane %v1947, %v2114
        %v2116 = vlaneseq
        %v2117 = vshrl.u32 %v2116, 7
        %v2118 = vsub.s32 %v958, %v2117
        %v2119 = vrot.slane %v1950, %v2118
        %v2120 = vsel %vm963, %v2119, %v2115
        %v2121 = vlaneseq
        %v2122 = vshrl.u32 %v2121, 7
        %v2123 = vsub.s32 %v344, %v2122
        %v2124 = vrot.slane %v1953, %v2123
        %v2125 = vlaneseq
        %v2126 = vshrl.u32 %v2125, 7
        %v2127 = vsub.s32 %v958, %v2126
        %v2128 = vrot.slane %v1956, %v2127
        %v2129 = vsel %vm963, %v2128, %v2124
        %v2130 = vlaneseq
        %v2131 = vshrl.u32 %v2130, 7
        %v2132 = vsub.s32 %v344, %v2131
        %v2133 = vrot.slane %v1959, %v2132
        %v2134 = vlaneseq
        %v2135 = vshrl.u32 %v2134, 7
        %v2136 = vsub.s32 %v958, %v2135
        %v2137 = vrot.slane %v1962, %v2136
        %v2138 = vsel %vm963, %v2137, %v2133
        %v2139 = vsel %vm1100, %v2012, %v2003
        %v2140 = vsel %vm1102, %v2021, %v2139
        %v2141 = vsel %vm1104, %v2030, %v2140
        %v2142 = vsel %vm1106, %v2039, %v2141
        %v2143 = vsel %vm1108, %v2048, %v2142
        %v2144 = vsel %vm1110, %v2057, %v2143
        %v2145 = vsel %vm1112, %v2066, %v2144
        %v2146 = vsel %vm1100, %v2084, %v2075
        %v2147 = vsel %vm1102, %v2093, %v2146
        %v2148 = vsel %vm1104, %v2102, %v2147
        %v2149 = vsel %vm1106, %v2111, %v2148
        %v2150 = vsel %vm1108, %v2120, %v2149
        %v2151 = vsel %vm1110, %v2129, %v2150
        %v2152 = vsel %vm1112, %v2138, %v2151
        %v2155 = vmul.f32 %v338, %v2145
        %v2156 = vmul.f32 %v339, %v2152
        %v2157 = vadd.f32 %v304, %v2155
        %v2158 = vadd.f32 %v305, %v2156
        %2159 = vst.msk [vmem:[%s296] sm:$0xff] %vm825, %v2157
        %2160 = vst.msk [vmem:[%s296 + $0x8] sm:$0xff] %vm825, %v2158
        %v2161 = vsub.f32 0.0, %v2157
        %v2162 = vsub.f32 0.0, %v2158
        %v2163 = vmul.f32 %v2161, 1.442695
        %v2164 = vpow.pop %v2163
        %v2165 = vmul.f32 %v2162, 1.442695
        %v2166 = vpow.pop %v2165
        %v2167 = vadd.f32 %v2164, 1.0
        %v2168 = vadd.f32 %v2166, 1.0
        %v2169 = vrcp.pop %v2167
        %v2170 = vmul.f32 1.0, %v2169
        %v2171 = vrcp.pop %v2168
        %v2172 = vmul.f32 1.0, %v2171
        %2173 = vst.msk [vmem:[%s303] sm:$0xff] %vm825, %v2170
        %2174 = vst.msk [vmem:[%s303 + $0x8] sm:$0xff] %vm825, %v2172
        %s2175 = sand.u32 %s114, 1
        %s2176 = scalar_lea.sflag [#allocation4], %s2175
        %s2177 = sand.u32 %s114, 1
        %s2178 = smul.addr %s2177, 16
        %s2179 = scalar_lea.vmem [#allocation8], %s2178
        %s2180 = sand.u32 %s140, 1
        %s2181 = scalar_lea.sflag [#allocation10], %s2180
        %s2182 = sand.u32 %s140, 1
        %s2183 = smul.addr %s2182, 16
        %s2184 = scalar_lea.vmem [#allocation9], %s2183
        // Predicated region
        $region45: #{tpu_custom_call.1} parent=31 // pred_check
          %p2185 = pneg %p124
        $region46: #{tpu_custom_call.1} parent=31 // pred_check_branch
          %2187 = sbr.rel (%p2185) target = $region48
        $region47: #{tpu_custom_call.1} parent=31 // pred_region
          %s2189 = ssub.s32 256, 256
          %2190 = vsyncadd %s2176, %s2189
          %s2191 = smul.addr %s28, 2
          %s2192 = smul.addr %s2191, 128
          %s2193 = scalar_lea.hbm %s3, %s2192
          %s2194 = sshll.u32 %s2179, 4
          %s2195 = int_to_ptr.vmem [resolvable:$true] %s2194
          %2200 = dma.vmem_to_hbm [thread:$0]  %s2195, 256, %s2193, %s2176, 128, 128, 8
        $region48: #{tpu_custom_call.1} parent=31 // pred_fallthru
          _
        // Predicated region
        $region49: #{tpu_custom_call.1} parent=31 // pred_check
          %p2201 = pneg %p150
        $region50: #{tpu_custom_call.1} parent=31 // pred_check_branch
          %2203 = sbr.rel (%p2201) target = $region52
        $region51: #{tpu_custom_call.1} parent=31 // pred_region
          %s2205 = ssub.s32 256, 256
          %2206 = vsyncadd %s2181, %s2205
          %s2207 = smul.addr %s28, 2
          %s2208 = smul.addr %s2207, 128
          %s2209 = scalar_lea.hbm %s4, %s2208
          %s2210 = sshll.u32 %s2184, 4
          %s2211 = int_to_ptr.vmem [resolvable:$true] %s2210
          %2216 = dma.vmem_to_hbm [thread:$0]  %s2211, 256, %s2209, %s2181, 128, 128, 8
        $region52: #{tpu_custom_call.1} parent=31 // pred_fallthru
          _
      $region32: #{tpu_custom_call.1} parent=5 // pred_fallthru
        _
      %p2217 = scmp.le.s32.totalorder 2, %s23
      // Predicated region
      $region53: #{tpu_custom_call.1} parent=5 // pred_check
        %p2218 = pneg %p2217
      $region54: #{tpu_custom_call.1} parent=5 // pred_check_branch
        %2220 = sbr.rel (%p2218) target = $region56
      $region55: #{tpu_custom_call.1} parent=5 // pred_region
        %s2221 = ssub.s32 %s23, 2
        // Predicated region
        $region57: #{tpu_custom_call.1} parent=55 // pred_check
          %p2222 = pneg %p130
        $region58: #{tpu_custom_call.1} parent=55 // pred_check_branch
          %2224 = sbr.rel (%p2222) target = $region60
        $region59: #{tpu_custom_call.1} parent=55 // pred_region
          %s2225 = sand.u32 %s115, 1
          %s2226 = scalar_lea.sflag [#allocation4], %s2225
          %s2227 = sand.u32 %s115, 1
          %s2228 = smul.addr %s2227, 16
          %s2229 = scalar_lea.vmem [#allocation8], %s2228
          %2230 = dma.done %s2226, 256
        $region60: #{tpu_custom_call.1} parent=55 // pred_fallthru
          _
        // Predicated region
        $region61: #{tpu_custom_call.1} parent=55 // pred_check
          %p2231 = pneg %p156
        $region62: #{tpu_custom_call.1} parent=55 // pred_check_branch
          %2233 = sbr.rel (%p2231) target = $region64
        $region63: #{tpu_custom_call.1} parent=55 // pred_region
          %s2234 = sand.u32 %s141, 1
          %s2235 = scalar_lea.sflag [#allocation10], %s2234
          %s2236 = sand.u32 %s141, 1
          %s2237 = smul.addr %s2236, 16
          %s2238 = scalar_lea.vmem [#allocation9], %s2237
          %2239 = dma.done %s2235, 256
        $region64: #{tpu_custom_call.1} parent=55 // pred_fallthru
          _
      $region56: #{tpu_custom_call.1} parent=5 // pred_fallthru
        _
    $region6: #{tpu_custom_call.1} parent=1 // loop_footer
      %s27 = sadd.s32 1, %s23
    $region7: #{tpu_custom_call.1} parent=1 // loop_footer_branch
      %22 = sbr.rel target = $region3
    $region8: #{tpu_custom_call.1} parent=1 // loop_exit
      _
    %2240 = vsyncpa [#allocation3], 1
    %s2241 = scalar_lea.sflag [#allocation3], 1
    %2242 = vsyncpa %s2241, 1
    %2243 = vsyncpa [#allocation6], 1
    %s2244 = scalar_lea.sflag [#allocation6], 1
    %2245 = vsyncpa %s2244, 1
    %2246 = vsyncpa [#allocation4], 1
    %s2247 = scalar_lea.sflag [#allocation4], 1
    %2248 = vsyncpa %s2247, 1
    %2249 = vsyncpa [#allocation10], 1
    %s2250 = scalar_lea.sflag [#allocation10], 1
    %2251 = vsyncpa %s2250, 1

</llo_original>
